<compile_context>
chip_gen: v6e
topology: v6e:2x2x1
jax: 0.10.0
libtpu: 0.0.40
codegen_flags: <defaults>
</compile_context>

<pallas_src>
import math

import jax
import jax.numpy as jnp
from jax.experimental import pallas as pl
from jax.experimental.pallas import tpu as pltpu

# ----------------------------- logical sizes ----------------------------------------
D_IN = 32    # input features
H = 64       # hidden size (encoder / decoder)
Z = 16       # latent size

# ----------------------------- fused output slab layout -----------------------------
SLAB = 128                                   # lane-dense fused output width
_RECON_LO, _RECON_HI = 0, D_IN               # cols  0:32  recon
_MU_LO, _MU_HI = D_IN, D_IN + Z              # cols 32:48  mu
_LV_LO, _LV_HI = D_IN + Z, D_IN + 2 * Z      # cols 48:64  logvar
_Z_LO, _Z_HI = D_IN + 2 * Z, D_IN + 3 * Z    # cols 64:80  z


# ----------------------------- fused forward kernel ---------------------------------
def _vae_fwd_kernel(
    x_ref, eps_ref,
    we_ref, be_ref,
    wst_ref, bst_ref,          # fused [Wmu | Wlv] -> (H, 2Z), [bmu | blv] -> (1, 2Z)
    wd1_ref, bd1_ref,
    wd2_ref, bd2_ref,
    out_ref,                   # (TB, SLAB) fused output slab
):
    x = x_ref[...]                                          # (TB, D_IN) f32

    # ---- encoder ----
    h = jnp.dot(x, we_ref[...], preferred_element_type=jnp.float32) + be_ref[...]
    h = jnp.maximum(h, 0.0)                                 # (TB, H)

    # fused mu/logvar projection: one MXU push, result is [mu | logvar]
    stats = jnp.dot(h, wst_ref[...], preferred_element_type=jnp.float32) + bst_ref[...]
    mu = stats[:, :Z]                                       # (TB, Z)
    logvar = stats[:, Z:]                                   # (TB, Z)

    # ---- latent layer (reparameterization with externally supplied eps) ----
    std = jnp.exp(0.5 * logvar)
    z = mu + std * eps_ref[...]                             # (TB, Z)

    # ---- decoder ----
    d = jnp.dot(z, wd1_ref[...], preferred_element_type=jnp.float32) + bd1_ref[...]
    d = jnp.maximum(d, 0.0)                                 # (TB, H)
    recon = jnp.dot(d, wd2_ref[...], preferred_element_type=jnp.float32) + bd2_ref[...]

    # ---- single fused (TB, 128) output slab ----
    out_ref[:, _RECON_LO:_RECON_HI] = recon
    out_ref[:, _MU_LO:_LV_HI] = stats                       # mu || logvar, cols 32:64
    out_ref[:, _Z_LO:_Z_HI] = z
    out_ref[:, _Z_HI:] = jnp.zeros((x.shape[0], SLAB - _Z_HI), jnp.float32)


# ----------------------------- one-time parameter prep ------------------------------
def prepare_params(params):
    """Fuse the mu/logvar projections once at init (hoisted out of forward)."""
    we, be, wmu, bmu, wlv, blv, wd1, bd1, wd2, bd2 = params
    wst = jnp.concatenate([wmu, wlv], axis=1)   # (H, 2Z)
    bst = jnp.concatenate([bmu, blv], axis=1)   # (1, 2Z)
    return (we, be, wst, bst, wd1, bd1, wd2, bd2)


# ----------------------------- wrapper -----------------------------------------------
def _choose_tb(B):
    # <=512 rows per tile; keep the grid at >=2 steps when possible so v7x's
    # two TensorCores both get work (no-op on v5e/v6e single-TC chips).
    tb = min(512, pl.next_power_of_2(pl.cdiv(max(B, 16), 2)))
    return max(tb, 8)


def _pad_rows(a, rows):
    pad = rows - a.shape[0]
    return a if pad == 0 else jnp.pad(a, ((0, pad), (0, 0)))


@jax.jit
def vae_forward(x, eps, prepared):
    """Fused encoder -> latent -> decoder forward, batch-tiled Pallas kernel.

    Returns a dict mimicking the PyTorch `data` dict after the three updates.
    """
    we, be, wst, bst, wd1, bd1, wd2, bd2 = prepared
    B = x.shape[0]
    TB = _choose_tb(B)
    n_tiles = pl.cdiv(B, TB)
    B_pad = n_tiles * TB

    x_p = _pad_rows(x, B_pad)        # (B_pad, D_IN)  -- no column padding
    eps_p = _pad_rows(eps, B_pad)    # (B_pad, Z)

    ins = (x_p, eps_p, we, be, wst, bst, wd1, bd1, wd2, bd2)

    def _tile(cols):
        # batch-tiled block, last dim equals full array dim (legal, lane-sparse input ok)
        return pl.BlockSpec((TB, cols), lambda i: (i, 0))

    def _resident(a):
        # full weight block, constant index_map -> resident across grid steps
        return pl.BlockSpec(a.shape, lambda i: (0, 0))

    in_specs = [_tile(D_IN), _tile(Z)] + [_resident(a) for a in ins[2:]]
    out_specs = _tile(SLAB)

    flops = 2 * B_pad * (D_IN * H + H * 2 * Z + Z * H + H * D_IN)
    bytes_accessed = 4 * (sum(math.prod(a.shape) for a in ins) + B_pad * SLAB)
    cost = pl.CostEstimate(
        flops=flops,
        transcendentals=B_pad * Z,
        bytes_accessed=bytes_accessed,
    )

    slab = pl.pallas_call(
        _vae_fwd_kernel,
        out_shape=jax.ShapeDtypeStruct((B_pad, SLAB), jnp.float32),
        grid=(n_tiles,),
        in_specs=in_specs,
        out_specs=out_specs,
        compiler_params=pltpu.CompilerParams(
            dimension_semantics=("parallel",),
        ),
        cost_estimate=cost,
    )(*ins)

    # slice the fused slab back to logical outputs (single wrapper-side slab)
    return {
        "recon": slab[:B, _RECON_LO:_RECON_HI],
        "mu": slab[:B, _MU_LO:_MU_HI],
        "logvar": slab[:B, _LV_LO:_LV_HI],
        "z": slab[:B, _Z_LO:_Z_HI],
    }


# TODO(synk): Model.sample(z) (decoder-only path) is not exercised here; the
# fused kernel covers the forward() hot path.


# ----------------------------- deterministic parameter init -------------------------
def init_params(key):
    ks = jax.random.split(key, 10)

    def w(k, shape, fan_in):
        return (jax.random.normal(k, shape, jnp.float32) / jnp.sqrt(fan_in)).astype(jnp.float32)

    we = w(ks[0], (D_IN, H), D_IN)
    be = jnp.zeros((1, H), jnp.float32)
    wmu = w(ks[1], (H, Z), H)
    bmu = jnp.zeros((1, Z), jnp.float32)
    wlv = w(ks[2], (H, Z), H)
    blv = jnp.zeros((1, Z), jnp.float32)
    wd1 = w(ks[3], (Z, H), Z)
    bd1 = jnp.zeros((1, H), jnp.float32)
    wd2 = w(ks[4], (H, D_IN), H)
    bd2 = jnp.zeros((1, D_IN), jnp.float32)
    return (we, be, wmu, bmu, wlv, blv, wd1, bd1, wd2, bd2)


# ----------------------------- reference (plain JAX) check --------------------------
def vae_forward_ref(x, eps, params):
    we, be, wmu, bmu, wlv, blv, wd1, bd1, wd2, bd2 = params
    hp = jax.lax.Precision.HIGHEST
    h = jnp.maximum(jnp.dot(x, we, precision=hp) + be, 0.0)
    mu = jnp.dot(h, wmu, precision=hp) + bmu
    logvar = jnp.dot(h, wlv, precision=hp) + blv
    z = mu + jnp.exp(0.5 * logvar) * eps
    d = jnp.maximum(jnp.dot(z, wd1, precision=hp) + bd1, 0.0)
    recon = jnp.dot(d, wd2, precision=hp) + bd2
    return {"recon": recon, "mu": mu, "logvar": logvar, "z": z}


if __name__ == "__main__":
    key = jax.random.PRNGKey(0)
    k_x, k_eps, k_p = jax.random.split(key, 3)

    # Batch large enough to exercise multiple grid steps (2 x TB=128 tiles),
    # still tiny overall; feature sizes stay the module's logical 32/64/16.
    B = 256
    x = jax.random.normal(k_x, (B, D_IN), jnp.float32)
    eps = jax.random.normal(k_eps, (B, Z), jnp.float32)
    params = init_params(k_p)
    prepared = prepare_params(params)   # one-time weight prep (hoisted)

    out = vae_forward(x, eps, prepared)
    jax.block_until_ready(out)

    ref = vae_forward_ref(x, eps, params)
    for name in ("recon", "mu", "logvar", "z"):
        assert out[name].shape == ref[name].shape, name
        assert jnp.allclose(out[name], ref[name], atol=1e-3, rtol=1e-3), name

    print("KERNEL_OK")
</pallas_src>

<mosaic_0001>
module attributes {stable_mosaic.version = 11 : i64} {
  func.func @_vae_fwd_kernel(%arg0: i32, %arg1: memref<128x32xf32, #tpu.memory_space<vmem>>, %arg2: memref<128x16xf32, #tpu.memory_space<vmem>>, %arg3: memref<32x64xf32, #tpu.memory_space<vmem>>, %arg4: memref<1x64xf32, #tpu.memory_space<vmem>>, %arg5: memref<64x32xf32, #tpu.memory_space<vmem>>, %arg6: memref<1x32xf32, #tpu.memory_space<vmem>>, %arg7: memref<16x64xf32, #tpu.memory_space<vmem>>, %arg8: memref<1x64xf32, #tpu.memory_space<vmem>>, %arg9: memref<64x32xf32, #tpu.memory_space<vmem>>, %arg10: memref<1x32xf32, #tpu.memory_space<vmem>>, %arg11: memref<128x128xf32, #tpu.memory_space<vmem>>) attributes {dimension_semantics = [#tpu.dimension_semantics<parallel>], iteration_bounds = array<i64: 2>, scalar_prefetch = 0 : i64, scratch_operands = 0 : i64, tpu.core_type = #tpu.core_type<tc>, window_params = [{transform_indices = @transform_0, window_bounds = array<i64: 128, 32>}, {transform_indices = @transform_1, window_bounds = array<i64: 128, 16>}, {pipeline_mode = #tpu.pipeline_mode<synchronous>, transform_indices = @transform_2, window_bounds = array<i64: 32, 64>}, {pipeline_mode = #tpu.pipeline_mode<synchronous>, transform_indices = @transform_3, window_bounds = array<i64: 1, 64>}, {pipeline_mode = #tpu.pipeline_mode<synchronous>, transform_indices = @transform_4, window_bounds = array<i64: 64, 32>}, {pipeline_mode = #tpu.pipeline_mode<synchronous>, transform_indices = @transform_5, window_bounds = array<i64: 1, 32>}, {pipeline_mode = #tpu.pipeline_mode<synchronous>, transform_indices = @transform_6, window_bounds = array<i64: 16, 64>}, {pipeline_mode = #tpu.pipeline_mode<synchronous>, transform_indices = @transform_7, window_bounds = array<i64: 1, 64>}, {pipeline_mode = #tpu.pipeline_mode<synchronous>, transform_indices = @transform_8, window_bounds = array<i64: 64, 32>}, {pipeline_mode = #tpu.pipeline_mode<synchronous>, transform_indices = @transform_9, window_bounds = array<i64: 1, 32>}, {transform_indices = @transform_10, window_bounds = array<i64: 128, 128>}]} {
    %c0 = arith.constant 0 : index
    %c0_0 = arith.constant 0 : index
    %0 = vector.load %arg1[%c0, %c0_0] : memref<128x32xf32, #tpu.memory_space<vmem>>, vector<128x32xf32>
    %c0_1 = arith.constant 0 : index
    %c0_2 = arith.constant 0 : index
    %1 = vector.load %arg3[%c0_1, %c0_2] : memref<32x64xf32, #tpu.memory_space<vmem>>, vector<32x64xf32>
    %cst = arith.constant dense<0.000000e+00> : vector<128x64xf32>
    %2 = tpu.matmul %0, %1, %cst {dimension_numbers = #tpu.dot_dimension_numbers<[1], [0], [0], [1], [0, 0, 1, 1], [], []>} : vector<128x32xf32>, vector<32x64xf32>, vector<128x64xf32> -> vector<128x64xf32>
    %c0_3 = arith.constant 0 : index
    %c0_4 = arith.constant 0 : index
    %3 = vector.load %arg4[%c0_3, %c0_4] : memref<1x64xf32, #tpu.memory_space<vmem>>, vector<1x64xf32>
    %4 = vector.broadcast %3 : vector<1x64xf32> to vector<128x64xf32>
    %5 = arith.addf %2, %4 : vector<128x64xf32>
    %cst_5 = arith.constant 0.000000e+00 : f32
    %6 = vector.broadcast %cst_5 : f32 to vector<128x64xf32>
    %7 = arith.maximumf %5, %6 : vector<128x64xf32>
    %c0_6 = arith.constant 0 : index
    %c0_7 = arith.constant 0 : index
    %8 = vector.load %arg5[%c0_6, %c0_7] : memref<64x32xf32, #tpu.memory_space<vmem>>, vector<64x32xf32>
    %cst_8 = arith.constant dense<0.000000e+00> : vector<128x32xf32>
    %9 = tpu.matmul %7, %8, %cst_8 {dimension_numbers = #tpu.dot_dimension_numbers<[1], [0], [0], [1], [0, 0, 1, 1], [], []>} : vector<128x64xf32>, vector<64x32xf32>, vector<128x32xf32> -> vector<128x32xf32>
    %c0_9 = arith.constant 0 : index
    %c0_10 = arith.constant 0 : index
    %10 = vector.load %arg6[%c0_9, %c0_10] : memref<1x32xf32, #tpu.memory_space<vmem>>, vector<1x32xf32>
    %11 = vector.broadcast %10 : vector<1x32xf32> to vector<128x32xf32>
    %12 = arith.addf %9, %11 : vector<128x32xf32>
    %13 = vector.extract_strided_slice %12 {offsets = [0, 0], sizes = [128, 16], strides = [1, 1]} : vector<128x32xf32> to vector<128x16xf32>
    %14 = vector.extract_strided_slice %12 {offsets = [0, 16], sizes = [128, 16], strides = [1, 1]} : vector<128x32xf32> to vector<128x16xf32>
    %cst_11 = arith.constant 5.000000e-01 : f32
    %15 = vector.broadcast %cst_11 : f32 to vector<128x16xf32>
    %16 = arith.mulf %15, %14 : vector<128x16xf32>
    %17 = math.exp %16 : vector<128x16xf32>
    %c0_12 = arith.constant 0 : index
    %c0_13 = arith.constant 0 : index
    %18 = vector.load %arg2[%c0_12, %c0_13] : memref<128x16xf32, #tpu.memory_space<vmem>>, vector<128x16xf32>
    %19 = arith.mulf %17, %18 : vector<128x16xf32>
    %20 = arith.addf %13, %19 : vector<128x16xf32>
    %c0_14 = arith.constant 0 : index
    %c0_15 = arith.constant 0 : index
    %21 = vector.load %arg7[%c0_14, %c0_15] : memref<16x64xf32, #tpu.memory_space<vmem>>, vector<16x64xf32>
    %cst_16 = arith.constant dense<0.000000e+00> : vector<128x64xf32>
    %22 = tpu.matmul %20, %21, %cst_16 {dimension_numbers = #tpu.dot_dimension_numbers<[1], [0], [0], [1], [0, 0, 1, 1], [], []>} : vector<128x16xf32>, vector<16x64xf32>, vector<128x64xf32> -> vector<128x64xf32>
    %c0_17 = arith.constant 0 : index
    %c0_18 = arith.constant 0 : index
    %23 = vector.load %arg8[%c0_17, %c0_18] : memref<1x64xf32, #tpu.memory_space<vmem>>, vector<1x64xf32>
    %24 = vector.broadcast %23 : vector<1x64xf32> to vector<128x64xf32>
    %25 = arith.addf %22, %24 : vector<128x64xf32>
    %cst_19 = arith.constant 0.000000e+00 : f32
    %26 = vector.broadcast %cst_19 : f32 to vector<128x64xf32>
    %27 = arith.maximumf %25, %26 : vector<128x64xf32>
    %c0_20 = arith.constant 0 : index
    %c0_21 = arith.constant 0 : index
    %28 = vector.load %arg9[%c0_20, %c0_21] : memref<64x32xf32, #tpu.memory_space<vmem>>, vector<64x32xf32>
    %cst_22 = arith.constant dense<0.000000e+00> : vector<128x32xf32>
    %29 = tpu.matmul %27, %28, %cst_22 {dimension_numbers = #tpu.dot_dimension_numbers<[1], [0], [0], [1], [0, 0, 1, 1], [], []>} : vector<128x64xf32>, vector<64x32xf32>, vector<128x32xf32> -> vector<128x32xf32>
    %c0_23 = arith.constant 0 : index
    %c0_24 = arith.constant 0 : index
    %30 = vector.load %arg10[%c0_23, %c0_24] : memref<1x32xf32, #tpu.memory_space<vmem>>, vector<1x32xf32>
    %31 = vector.broadcast %30 : vector<1x32xf32> to vector<128x32xf32>
    %32 = arith.addf %29, %31 : vector<128x32xf32>
    %c0_25 = arith.constant 0 : index
    %c0_26 = arith.constant 0 : index
    %33 = vector.load %arg11[%c0_25, %c0_26] : memref<128x128xf32, #tpu.memory_space<vmem>>, vector<128x32xf32>
    tpu.vector_store %arg11[%c0_25, %c0_26], %32 {strides = array<i32>} : memref<128x128xf32, #tpu.memory_space<vmem>>, vector<128x32xf32>,
    %c0_27 = arith.constant 0 : index
    %c32 = arith.constant 32 : index
    %34 = vector.load %arg11[%c0_27, %c32] : memref<128x128xf32, #tpu.memory_space<vmem>>, vector<128x32xf32>
    tpu.vector_store %arg11[%c0_27, %c32], %12 {strides = array<i32>} : memref<128x128xf32, #tpu.memory_space<vmem>>, vector<128x32xf32>,
    %c0_28 = arith.constant 0 : index
    %c64 = arith.constant 64 : index
    %35 = vector.load %arg11[%c0_28, %c64] : memref<128x128xf32, #tpu.memory_space<vmem>>, vector<128x16xf32>
    tpu.vector_store %arg11[%c0_28, %c64], %20 {strides = array<i32>} : memref<128x128xf32, #tpu.memory_space<vmem>>, vector<128x16xf32>,
    %cst_29 = arith.constant 0.000000e+00 : f32
    %36 = vector.broadcast %cst_29 : f32 to vector<128x48xf32>
    %c0_30 = arith.constant 0 : index
    %c80 = arith.constant 80 : index
    %37 = vector.load %arg11[%c0_30, %c80] : memref<128x128xf32, #tpu.memory_space<vmem>>, vector<128x48xf32>
    tpu.vector_store %arg11[%c0_30, %c80], %36 {strides = array<i32>} : memref<128x128xf32, #tpu.memory_space<vmem>>, vector<128x48xf32>,
    return
  }
  func.func @transform_0(%arg0: i32) -> (i32, i32) {
    %c0_i32 = arith.constant 0 : i32
    %c0_i32_0 = arith.constant 0 : i32
    return %arg0, %c0_i32 : i32, i32
  }
  func.func @transform_1(%arg0: i32) -> (i32, i32) {
    %c0_i32 = arith.constant 0 : i32
    %c0_i32_0 = arith.constant 0 : i32
    return %arg0, %c0_i32 : i32, i32
  }
  func.func @transform_2(%arg0: i32) -> (i32, i32) {
    %c0_i32 = arith.constant 0 : i32
    %c0_i32_0 = arith.constant 0 : i32
    %c0_i32_1 = arith.constant 0 : i32
    return %c0_i32, %c0_i32_0 : i32, i32
  }
  func.func @transform_3(%arg0: i32) -> (i32, i32) {
    %c0_i32 = arith.constant 0 : i32
    %c0_i32_0 = arith.constant 0 : i32
    %c0_i32_1 = arith.constant 0 : i32
    return %c0_i32, %c0_i32_0 : i32, i32
  }
  func.func @transform_4(%arg0: i32) -> (i32, i32) {
    %c0_i32 = arith.constant 0 : i32
    %c0_i32_0 = arith.constant 0 : i32
    %c0_i32_1 = arith.constant 0 : i32
    return %c0_i32, %c0_i32_0 : i32, i32
  }
  func.func @transform_5(%arg0: i32) -> (i32, i32) {
    %c0_i32 = arith.constant 0 : i32
    %c0_i32_0 = arith.constant 0 : i32
    %c0_i32_1 = arith.constant 0 : i32
    return %c0_i32, %c0_i32_0 : i32, i32
  }
  func.func @transform_6(%arg0: i32) -> (i32, i32) {
    %c0_i32 = arith.constant 0 : i32
    %c0_i32_0 = arith.constant 0 : i32
    %c0_i32_1 = arith.constant 0 : i32
    return %c0_i32, %c0_i32_0 : i32, i32
  }
  func.func @transform_7(%arg0: i32) -> (i32, i32) {
    %c0_i32 = arith.constant 0 : i32
    %c0_i32_0 = arith.constant 0 : i32
    %c0_i32_1 = arith.constant 0 : i32
    return %c0_i32, %c0_i32_0 : i32, i32
  }
  func.func @transform_8(%arg0: i32) -> (i32, i32) {
    %c0_i32 = arith.constant 0 : i32
    %c0_i32_0 = arith.constant 0 : i32
    %c0_i32_1 = arith.constant 0 : i32
    return %c0_i32, %c0_i32_0 : i32, i32
  }
  func.func @transform_9(%arg0: i32) -> (i32, i32) {
    %c0_i32 = arith.constant 0 : i32
    %c0_i32_0 = arith.constant 0 : i32
    %c0_i32_1 = arith.constant 0 : i32
    return %c0_i32, %c0_i32_0 : i32, i32
  }
  func.func @transform_10(%arg0: i32) -> (i32, i32) {
    %c0_i32 = arith.constant 0 : i32
    %c0_i32_0 = arith.constant 0 : i32
    return %arg0, %c0_i32 : i32, i32
  }
}

</mosaic_0001>

<llo_original>
// kernel: vae_forward.1
$region0: #{vae_forward.1}
  #allocation0 [shape = 'u32[]', space=smem, size = 0x4, offset = 0x4, fixed_abs, tag = 'smem constant byte address 0x4 - core index']
  #allocation1 [shape = 'u32[144,128]{1,0:T(1,128)}', space=vmem, size = 0x12000, scoped, tag = 'internal scratch']
  %s0 = inlined_call_operand.vmem [shape: f32[256,32], index: 0, kind: input, shape index: {}]
  %s1 = inlined_call_operand.vmem [shape: f32[256,16], index: 1, kind: input, shape index: {}]
  %s2 = inlined_call_operand.vmem [shape: f32[32,64], index: 2, kind: input, shape index: {}]
  %s3 = inlined_call_operand.vmem [shape: f32[1,64], index: 3, kind: input, shape index: {}]
  %s4 = inlined_call_operand.vmem [shape: f32[64,32], index: 4, kind: input, shape index: {}]
  %s5 = inlined_call_operand.vmem [shape: f32[1,32], index: 5, kind: input, shape index: {}]
  %s6 = inlined_call_operand.vmem [shape: f32[16,64], index: 6, kind: input, shape index: {}]
  %s7 = inlined_call_operand.vmem [shape: f32[1,64], index: 7, kind: input, shape index: {}]
  %s8 = inlined_call_operand.vmem [shape: f32[64,32], index: 8, kind: input, shape index: {}]
  %s9 = inlined_call_operand.vmem [shape: f32[1,32], index: 9, kind: input, shape index: {}]
  %s10 = inlined_call_operand.vmem [shape: f32[256,128], index: 10, kind: output, shape index: {}]
  %s11 = sld [smem:[#allocation0]]
  $region73: #{vae_forward.1} parent=0
    _
  %s13 = ssub.s32 1, %s11
  %s14 = scalar_select 0, %s13, %s11
  loop: start=0, step=1, limit=4
  $region2: #{vae_forward.1} parent=0 // loop_pre_header
    _
  $region3: #{vae_forward.1} parent=0 // loop_header
    %s16 = sphi 0, %s20
    %p17 = scmp.ge.s32.totalorder %s16, 4
    %s26 = sphi 0, %s28
    %s29 = sphi 0, %s26
    %s30 = sphi 0, %s29
    %s46 = sphi 0, %s30
    %s52 = sphi 0, %s54
    %s55 = sphi 0, %s52
    %s56 = sphi 0, %s55
    %s72 = sphi 0, %s56
    %s76 = sphi 0, %s76
    %s78 = sphi 0, %s76
    %s79 = sphi 0, %s78
    %s93 = sphi 0, %s79
    %s97 = sphi 0, %s97
    %s99 = sphi 0, %s97
    %s100 = sphi 0, %s99
    %s114 = sphi 0, %s100
    %s118 = sphi 0, %s118
    %s120 = sphi 0, %s118
    %s121 = sphi 0, %s120
    %s135 = sphi 0, %s121
    %s139 = sphi 0, %s139
    %s141 = sphi 0, %s139
    %s142 = sphi 0, %s141
    %s156 = sphi 0, %s142
    %s160 = sphi 0, %s160
    %s162 = sphi 0, %s160
    %s163 = sphi 0, %s162
    %s177 = sphi 0, %s163
    %s181 = sphi 0, %s181
    %s183 = sphi 0, %s181
    %s184 = sphi 0, %s183
    %s198 = sphi 0, %s184
    %s202 = sphi 0, %s202
    %s204 = sphi 0, %s202
    %s205 = sphi 0, %s204
    %s219 = sphi 0, %s205
    %s223 = sphi 0, %s223
    %s225 = sphi 0, %s223
    %s226 = sphi 0, %s225
    %s240 = sphi 0, %s226
    %s246 = sphi 0, %s248
    %s249 = sphi 0, %s246
    %s250 = sphi 0, %s249
    %s266 = sphi 0, %s250
  $region4: #{vae_forward.1} parent=0 // loop_header_branch
    %19 = sbr.rel (%p17) target = $region8
  $region5: #{vae_forward.1} parent=0 // loop_body
    %s21 = ssub.s32 %s16, 1
    %s22 = ssub.s32 %s16, 2
    %s23 = sadd.s32 %s16, 1
    %s24 = ssub.s32 %s16, %s23
    %p25 = scmp.eq.s32.totalorder %s24, 0
    %s27 = sadd.s32 %s26, 1
    %s28 = scalar_select %p25, %s26, %s27
    %p31 = pneg %p25
    %p32 = scmp.eq.s32.totalorder %s16, 1
    %p33 = por %p31, %p32
    %p34 = scmp.ne.s32.totalorder %s26, %s29
    %p35 = scmp.eq.s32.totalorder %s16, 0
    %p36 = por %p34, %p35
    %p37 = scmp.ne.s32.totalorder %s26, %s29
    %p38 = scmp.eq.s32.totalorder %s21, 1
    %p39 = por %p37, %p38
    %p40 = scmp.ne.s32.totalorder %s29, %s30
    %p41 = scmp.eq.s32.totalorder %s21, 0
    %p42 = por %p40, %p41
    %p43 = scmp.ne.s32.totalorder %s29, %s30
    %p44 = scmp.eq.s32.totalorder %s22, 1
    %p45 = por %p43, %p44
    %p47 = scmp.ne.s32.totalorder %s30, %s46
    %p48 = scmp.eq.s32.totalorder %s22, 0
    %p49 = por %p47, %p48
    %s50 = ssub.s32 %s16, %s23
    %p51 = scmp.eq.s32.totalorder %s50, 0
    %s53 = sadd.s32 %s52, 1
    %s54 = scalar_select %p51, %s52, %s53
    %p57 = pneg %p51
    %p58 = scmp.eq.s32.totalorder %s16, 1
    %p59 = por %p57, %p58
    %p60 = scmp.ne.s32.totalorder %s52, %s55
    %p61 = scmp.eq.s32.totalorder %s16, 0
    %p62 = por %p60, %p61
    %p63 = scmp.ne.s32.totalorder %s52, %s55
    %p64 = scmp.eq.s32.totalorder %s21, 1
    %p65 = por %p63, %p64
    %p66 = scmp.ne.s32.totalorder %s55, %s56
    %p67 = scmp.eq.s32.totalorder %s21, 0
    %p68 = por %p66, %p67
    %p69 = scmp.ne.s32.totalorder %s55, %s56
    %p70 = scmp.eq.s32.totalorder %s22, 1
    %p71 = por %p69, %p70
    %p73 = scmp.ne.s32.totalorder %s56, %s72
    %p74 = scmp.eq.s32.totalorder %s22, 0
    %p75 = por %p73, %p74
    %s77 = sadd.s32 %s76, 1
    %p80 = scmp.eq.s32.totalorder %s16, 1
    %p81 = scmp.ne.s32.totalorder %s76, %s78
    %p82 = scmp.eq.s32.totalorder %s16, 0
    %p83 = por %p81, %p82
    %p84 = scmp.ne.s32.totalorder %s76, %s78
    %p85 = scmp.eq.s32.totalorder %s21, 1
    %p86 = por %p84, %p85
    %p87 = scmp.ne.s32.totalorder %s78, %s79
    %p88 = scmp.eq.s32.totalorder %s21, 0
    %p89 = por %p87, %p88
    %p90 = scmp.ne.s32.totalorder %s78, %s79
    %p91 = scmp.eq.s32.totalorder %s22, 1
    %p92 = por %p90, %p91
    %p94 = scmp.ne.s32.totalorder %s79, %s93
    %p95 = scmp.eq.s32.totalorder %s22, 0
    %p96 = por %p94, %p95
    %s98 = sadd.s32 %s97, 1
    %p101 = scmp.eq.s32.totalorder %s16, 1
    %p102 = scmp.ne.s32.totalorder %s97, %s99
    %p103 = scmp.eq.s32.totalorder %s16, 0
    %p104 = por %p102, %p103
    %p105 = scmp.ne.s32.totalorder %s97, %s99
    %p106 = scmp.eq.s32.totalorder %s21, 1
    %p107 = por %p105, %p106
    %p108 = scmp.ne.s32.totalorder %s99, %s100
    %p109 = scmp.eq.s32.totalorder %s21, 0
    %p110 = por %p108, %p109
    %p111 = scmp.ne.s32.totalorder %s99, %s100
    %p112 = scmp.eq.s32.totalorder %s22, 1
    %p113 = por %p111, %p112
    %p115 = scmp.ne.s32.totalorder %s100, %s114
    %p116 = scmp.eq.s32.totalorder %s22, 0
    %p117 = por %p115, %p116
    %s119 = sadd.s32 %s118, 1
    %p122 = scmp.eq.s32.totalorder %s16, 1
    %p123 = scmp.ne.s32.totalorder %s118, %s120
    %p124 = scmp.eq.s32.totalorder %s16, 0
    %p125 = por %p123, %p124
    %p126 = scmp.ne.s32.totalorder %s118, %s120
    %p127 = scmp.eq.s32.totalorder %s21, 1
    %p128 = por %p126, %p127
    %p129 = scmp.ne.s32.totalorder %s120, %s121
    %p130 = scmp.eq.s32.totalorder %s21, 0
    %p131 = por %p129, %p130
    %p132 = scmp.ne.s32.totalorder %s120, %s121
    %p133 = scmp.eq.s32.totalorder %s22, 1
    %p134 = por %p132, %p133
    %p136 = scmp.ne.s32.totalorder %s121, %s135
    %p137 = scmp.eq.s32.totalorder %s22, 0
    %p138 = por %p136, %p137
    %s140 = sadd.s32 %s139, 1
    %p143 = scmp.eq.s32.totalorder %s16, 1
    %p144 = scmp.ne.s32.totalorder %s139, %s141
    %p145 = scmp.eq.s32.totalorder %s16, 0
    %p146 = por %p144, %p145
    %p147 = scmp.ne.s32.totalorder %s139, %s141
    %p148 = scmp.eq.s32.totalorder %s21, 1
    %p149 = por %p147, %p148
    %p150 = scmp.ne.s32.totalorder %s141, %s142
    %p151 = scmp.eq.s32.totalorder %s21, 0
    %p152 = por %p150, %p151
    %p153 = scmp.ne.s32.totalorder %s141, %s142
    %p154 = scmp.eq.s32.totalorder %s22, 1
    %p155 = por %p153, %p154
    %p157 = scmp.ne.s32.totalorder %s142, %s156
    %p158 = scmp.eq.s32.totalorder %s22, 0
    %p159 = por %p157, %p158
    %s161 = sadd.s32 %s160, 1
    %p164 = scmp.eq.s32.totalorder %s16, 1
    %p165 = scmp.ne.s32.totalorder %s160, %s162
    %p166 = scmp.eq.s32.totalorder %s16, 0
    %p167 = por %p165, %p166
    %p168 = scmp.ne.s32.totalorder %s160, %s162
    %p169 = scmp.eq.s32.totalorder %s21, 1
    %p170 = por %p168, %p169
    %p171 = scmp.ne.s32.totalorder %s162, %s163
    %p172 = scmp.eq.s32.totalorder %s21, 0
    %p173 = por %p171, %p172
    %p174 = scmp.ne.s32.totalorder %s162, %s163
    %p175 = scmp.eq.s32.totalorder %s22, 1
    %p176 = por %p174, %p175
    %p178 = scmp.ne.s32.totalorder %s163, %s177
    %p179 = scmp.eq.s32.totalorder %s22, 0
    %p180 = por %p178, %p179
    %s182 = sadd.s32 %s181, 1
    %p185 = scmp.eq.s32.totalorder %s16, 1
    %p186 = scmp.ne.s32.totalorder %s181, %s183
    %p187 = scmp.eq.s32.totalorder %s16, 0
    %p188 = por %p186, %p187
    %p189 = scmp.ne.s32.totalorder %s181, %s183
    %p190 = scmp.eq.s32.totalorder %s21, 1
    %p191 = por %p189, %p190
    %p192 = scmp.ne.s32.totalorder %s183, %s184
    %p193 = scmp.eq.s32.totalorder %s21, 0
    %p194 = por %p192, %p193
    %p195 = scmp.ne.s32.totalorder %s183, %s184
    %p196 = scmp.eq.s32.totalorder %s22, 1
    %p197 = por %p195, %p196
    %p199 = scmp.ne.s32.totalorder %s184, %s198
    %p200 = scmp.eq.s32.totalorder %s22, 0
    %p201 = por %p199, %p200
    %s203 = sadd.s32 %s202, 1
    %p206 = scmp.eq.s32.totalorder %s16, 1
    %p207 = scmp.ne.s32.totalorder %s202, %s204
    %p208 = scmp.eq.s32.totalorder %s16, 0
    %p209 = por %p207, %p208
    %p210 = scmp.ne.s32.totalorder %s202, %s204
    %p211 = scmp.eq.s32.totalorder %s21, 1
    %p212 = por %p210, %p211
    %p213 = scmp.ne.s32.totalorder %s204, %s205
    %p214 = scmp.eq.s32.totalorder %s21, 0
    %p215 = por %p213, %p214
    %p216 = scmp.ne.s32.totalorder %s204, %s205
    %p217 = scmp.eq.s32.totalorder %s22, 1
    %p218 = por %p216, %p217
    %p220 = scmp.ne.s32.totalorder %s205, %s219
    %p221 = scmp.eq.s32.totalorder %s22, 0
    %p222 = por %p220, %p221
    %s224 = sadd.s32 %s223, 1
    %p227 = scmp.eq.s32.totalorder %s16, 1
    %p228 = scmp.ne.s32.totalorder %s223, %s225
    %p229 = scmp.eq.s32.totalorder %s16, 0
    %p230 = por %p228, %p229
    %p231 = scmp.ne.s32.totalorder %s223, %s225
    %p232 = scmp.eq.s32.totalorder %s21, 1
    %p233 = por %p231, %p232
    %p234 = scmp.ne.s32.totalorder %s225, %s226
    %p235 = scmp.eq.s32.totalorder %s21, 0
    %p236 = por %p234, %p235
    %p237 = scmp.ne.s32.totalorder %s225, %s226
    %p238 = scmp.eq.s32.totalorder %s22, 1
    %p239 = por %p237, %p238
    %p241 = scmp.ne.s32.totalorder %s226, %s240
    %p242 = scmp.eq.s32.totalorder %s22, 0
    %p243 = por %p241, %p242
    %s244 = ssub.s32 %s16, %s23
    %p245 = scmp.eq.s32.totalorder %s244, 0
    %s247 = sadd.s32 %s246, 1
    %s248 = scalar_select %p245, %s246, %s247
    %p251 = pneg %p245
    %p252 = scmp.eq.s32.totalorder %s16, 1
    %p253 = por %p251, %p252
    %p254 = scmp.ne.s32.totalorder %s246, %s249
    %p255 = scmp.eq.s32.totalorder %s16, 0
    %p256 = por %p254, %p255
    %p257 = scmp.ne.s32.totalorder %s246, %s249
    %p258 = scmp.eq.s32.totalorder %s21, 1
    %p259 = por %p257, %p258
    %p260 = scmp.ne.s32.totalorder %s249, %s250
    %p261 = scmp.eq.s32.totalorder %s21, 0
    %p262 = por %p260, %p261
    %p263 = scmp.ne.s32.totalorder %s249, %s250
    %p264 = scmp.eq.s32.totalorder %s22, 1
    %p265 = por %p263, %p264
    %p267 = scmp.ne.s32.totalorder %s250, %s266
    %p268 = scmp.eq.s32.totalorder %s22, 0
    %p269 = por %p267, %p268
    %p270 = scmp.le.s32.totalorder 1, %s16
    %p271 = scmp.lt.s32.totalorder %s16, 3
    %p272 = pnand %p270, %p271
    %p273 = pneg %p272
    // Predicated region
    $region9: #{vae_forward.1} parent=5 // pred_check
      _
    $region10: #{vae_forward.1} parent=5 // pred_check_branch
      %275 = sbr.rel (%p272) target = $region12
    $region11: #{vae_forward.1} parent=5 // pred_region
      %s276 = ssub.s32 %s16, 1
      // Predicated region
      $region13: #{vae_forward.1} parent=11 // pred_check
        %p277 = pneg %p89
      $region14: #{vae_forward.1} parent=11 // pred_check_branch
        %279 = sbr.rel (%p277) target = $region16
      $region15: #{vae_forward.1} parent=11 // pred_region
        _
      $region16: #{vae_forward.1} parent=11 // pred_fallthru
        _
      // Predicated region
      $region17: #{vae_forward.1} parent=11 // pred_check
        %p280 = pneg %p110
      $region18: #{vae_forward.1} parent=11 // pred_check_branch
        %282 = sbr.rel (%p280) target = $region20
      $region19: #{vae_forward.1} parent=11 // pred_region
        _
      $region20: #{vae_forward.1} parent=11 // pred_fallthru
        _
      // Predicated region
      $region21: #{vae_forward.1} parent=11 // pred_check
        %p283 = pneg %p131
      $region22: #{vae_forward.1} parent=11 // pred_check_branch
        %285 = sbr.rel (%p283) target = $region24
      $region23: #{vae_forward.1} parent=11 // pred_region
        _
      $region24: #{vae_forward.1} parent=11 // pred_fallthru
        _
      // Predicated region
      $region25: #{vae_forward.1} parent=11 // pred_check
        %p286 = pneg %p152
      $region26: #{vae_forward.1} parent=11 // pred_check_branch
        %288 = sbr.rel (%p286) target = $region28
      $region27: #{vae_forward.1} parent=11 // pred_region
        _
      $region28: #{vae_forward.1} parent=11 // pred_fallthru
        _
      // Predicated region
      $region29: #{vae_forward.1} parent=11 // pred_check
        %p289 = pneg %p173
      $region30: #{vae_forward.1} parent=11 // pred_check_branch
        %291 = sbr.rel (%p289) target = $region32
      $region31: #{vae_forward.1} parent=11 // pred_region
        _
      $region32: #{vae_forward.1} parent=11 // pred_fallthru
        _
      // Predicated region
      $region33: #{vae_forward.1} parent=11 // pred_check
        %p292 = pneg %p194
      $region34: #{vae_forward.1} parent=11 // pred_check_branch
        %294 = sbr.rel (%p292) target = $region36
      $region35: #{vae_forward.1} parent=11 // pred_region
        _
      $region36: #{vae_forward.1} parent=11 // pred_fallthru
        _
      // Predicated region
      $region37: #{vae_forward.1} parent=11 // pred_check
        %p295 = pneg %p215
      $region38: #{vae_forward.1} parent=11 // pred_check_branch
        %297 = sbr.rel (%p295) target = $region40
      $region39: #{vae_forward.1} parent=11 // pred_region
        _
      $region40: #{vae_forward.1} parent=11 // pred_fallthru
        _
      // Predicated region
      $region41: #{vae_forward.1} parent=11 // pred_check
        %p298 = pneg %p236
      $region42: #{vae_forward.1} parent=11 // pred_check_branch
        %300 = sbr.rel (%p298) target = $region44
      $region43: #{vae_forward.1} parent=11 // pred_region
        _
      $region44: #{vae_forward.1} parent=11 // pred_fallthru
        _
    $region12: #{vae_forward.1} parent=5 // pred_fallthru
      _
    %p301 = scmp.lt.s32.totalorder %s16, 2
    // Predicated region
    $region45: #{vae_forward.1} parent=5 // pred_check
      %p302 = pneg %p301
    $region46: #{vae_forward.1} parent=5 // pred_check_branch
      %304 = sbr.rel (%p302) target = $region48
    $region47: #{vae_forward.1} parent=5 // pred_region
      // Predicated region
      $region49: #{vae_forward.1} parent=47 // pred_check
        %p305 = pneg %p36
      $region50: #{vae_forward.1} parent=47 // pred_check_branch
        %307 = sbr.rel (%p305) target = $region52
      $region51: #{vae_forward.1} parent=47 // pred_region
        %s308 = smul.u32 16, %s16
        %p309 = scmp.lt.s32.totalorder %s308, 31
        %s310 = scalar_select %p309, %s308, 31
        %s311 = smul.addr %s310, 8
        %s312 = scalar_lea.vmem %s0, %s311
        %s313 = smul.u32 16, %s16
      $region52: #{vae_forward.1} parent=47 // pred_fallthru
        _
      // Predicated region
      $region53: #{vae_forward.1} parent=47 // pred_check
        %p314 = pneg %p62
      $region54: #{vae_forward.1} parent=47 // pred_check_branch
        %316 = sbr.rel (%p314) target = $region56
      $region55: #{vae_forward.1} parent=47 // pred_region
        %s317 = smul.u32 16, %s16
        %p318 = scmp.lt.s32.totalorder %s317, 31
        %s319 = scalar_select %p318, %s317, 31
        %s320 = smul.addr %s319, 8
        %s321 = scalar_lea.vmem %s1, %s320
        %s322 = smul.u32 16, %s16
      $region56: #{vae_forward.1} parent=47 // pred_fallthru
        _
    $region48: #{vae_forward.1} parent=5 // pred_fallthru
      _
    %p323 = scmp.le.s32.totalorder 1, %s16
    %p324 = scmp.lt.s32.totalorder %s16, 3
    %p325 = pnand %p323, %p324
    %p326 = pneg %p325
    // Predicated region
    $region57: #{vae_forward.1} parent=5 // pred_check
      _
    $region58: #{vae_forward.1} parent=5 // pred_check_branch
      %328 = sbr.rel (%p325) target = $region60
    $region59: #{vae_forward.1} parent=5 // pred_region
      %s329 = ssub.s32 %s16, 1
      %s330 = smul.u32 16, %s21
      %p331 = scmp.lt.s32.totalorder %s330, 31
      %s332 = scalar_select %p331, %s330, 31
      %s333 = smul.addr %s332, 8
      %s334 = scalar_lea.vmem %s0, %s333
      %p335 = pneg %p42
      %p336 = pneg %p39
      %s337 = smul.u32 16, %s21
      %p338 = scmp.lt.s32.totalorder %s337, 31
      %s339 = scalar_select %p338, %s337, 31
      %s340 = smul.addr %s339, 8
      %s341 = scalar_lea.vmem %s1, %s340
      %p342 = pneg %p68
      %p343 = pneg %p65
      %p344 = pneg %p89
      %p345 = pneg %p86
      %p346 = pneg %p110
      %p347 = pneg %p107
      %p348 = pneg %p131
      %p349 = pneg %p128
      %p350 = pneg %p152
      %p351 = pneg %p149
      %p352 = pneg %p173
      %p353 = pneg %p170
      %p354 = pneg %p194
      %p355 = pneg %p191
      %p356 = pneg %p215
      %p357 = pneg %p212
      %p358 = pneg %p236
      %p359 = pneg %p233
      %p360 = pneg %p262
      %p361 = pneg %p259
      %s362 = smul.u32 16, %s21
      %p363 = scmp.lt.s32.totalorder %s362, 31
      %s364 = scalar_select %p363, %s362, 31
      %s365 = smul.addr %s364, 8
      %s366 = scalar_lea.vmem %s10, %s365
      %s367 = smul.u32 16, %s21
      %p368 = scmp.lt.s32.totalorder %s367, 31
      %s369 = scalar_select %p368, %s367, 31
      %s370 = smul.addr %s369, 8
      %s371 = scalar_lea.vmem %s0, %s370
      %s372 = smul.u32 16, %s21
      %s373 = smul.u32 16, %s21
      %p374 = scmp.lt.s32.totalorder %s373, 31
      %s375 = scalar_select %p374, %s373, 31
      %s376 = smul.addr %s375, 8
      %s377 = scalar_lea.vmem %s1, %s376
      %s378 = smul.u32 16, %s21
      %s379 = smul.u32 16, %s21
      %p380 = scmp.lt.s32.totalorder %s379, 31
      %s381 = scalar_select %p380, %s379, 31
      %s382 = smul.addr %s381, 8
      %s383 = scalar_lea.vmem %s10, %s382
      %s384 = smul.u32 16, %s21
      %v385 = vld [vmem:[%s371] sm:$0xff]
      %v386 = vld [vmem:[%s371 + $0x8] sm:$0xff]
      %v387 = vld [vmem:[%s371 + $0x10] sm:$0xff]
      %v388 = vld [vmem:[%s371 + $0x18] sm:$0xff]
      %v389 = vld [vmem:[%s371 + $0x20] sm:$0xff]
      %v390 = vld [vmem:[%s371 + $0x28] sm:$0xff]
      %v391 = vld [vmem:[%s371 + $0x30] sm:$0xff]
      %v392 = vld [vmem:[%s371 + $0x38] sm:$0xff]
      %v393 = vld [vmem:[%s371 + $0x40] sm:$0xff]
      %v394 = vld [vmem:[%s371 + $0x48] sm:$0xff]
      %v395 = vld [vmem:[%s371 + $0x50] sm:$0xff]
      %v396 = vld [vmem:[%s371 + $0x58] sm:$0xff]
      %v397 = vld [vmem:[%s371 + $0x60] sm:$0xff]
      %v398 = vld [vmem:[%s371 + $0x68] sm:$0xff]
      %v399 = vld [vmem:[%s371 + $0x70] sm:$0xff]
      %v400 = vld [vmem:[%s371 + $0x78] sm:$0xff]
      %v401 = vld [vmem:[%s2] sm:$0xff]
      %v402 = vld [vmem:[%s2 + $0x8] sm:$0xff]
      %v403 = vld [vmem:[%s2 + $0x10] sm:$0xff]
      %v404 = vld [vmem:[%s2 + $0x18] sm:$0xff]
      %v405 = vld [vmem:[%s3] sm:$0x1]
      %v407 = vlaneseq
      %v408 = vshrl.u32 %v407, 7
      %v409 = vsub.s32 0, %v408
      %v410 = vrot.slane %v405, %v409
      %vm412 = vcmask 261120
      %v414 = vsel %vm412, %v385, 0
      %v417 = vsel %vm412, %v386, 0
      %v420 = vsel %vm412, %v387, 0
      %v423 = vsel %vm412, %v388, 0
      %v426 = vsel %vm412, %v389, 0
      %v429 = vsel %vm412, %v390, 0
      %v432 = vsel %vm412, %v391, 0
      %v435 = vsel %vm412, %v392, 0
      %v438 = vsel %vm412, %v393, 0
      %v441 = vsel %vm412, %v394, 0
      %v444 = vsel %vm412, %v395, 0
      %v447 = vsel %vm412, %v396, 0
      %v450 = vsel %vm412, %v397, 0
      %v453 = vsel %vm412, %v398, 0
      %v456 = vsel %vm412, %v399, 0
      %v459 = vsel %vm412, %v400, 0
      %461 = vmatprep.subr.mxu0 0.0
      %462 = vmatpush1.msra.mxu0 0.0
      %463 = vmatprep.subr.mxu0 0.0
      %464 = vmatpush1.msra.mxu0 0.0
      %465 = vmatprep.subr.mxu0 0.0
      %466 = vmatpush1.msra.mxu0 0.0
      %467 = vmatprep.subr.mxu0 0.0
      %468 = vmatpush1.msra.mxu0 0.0
      %469 = vmatprep.subr.mxu0 0.0
      %470 = vmatpush1.msra.mxu0 0.0
      %471 = vmatprep.subr.mxu0 0.0
      %472 = vmatpush1.msra.mxu0 0.0
      %473 = vmatprep.subr.mxu0 0.0
      %474 = vmatpush1.msra.mxu0 0.0
      %475 = vmatprep.subr.mxu0 0.0
      %476 = vmatpush1.msra.mxu0 0.0
      %477 = vmatprep.subr.mxu0 0.0
      %478 = vmatpush1.msra.mxu0 0.0
      %479 = vmatprep.subr.mxu0 0.0
      %480 = vmatpush1.msra.mxu0 0.0
      %481 = vmatprep.subr.mxu0 0.0
      %482 = vmatpush1.msra.mxu0 0.0
      %483 = vmatprep.subr.mxu0 0.0
      %484 = vmatpush1.msra.mxu0 0.0
      %485 = vmatprep.subr.mxu0 0.0
      %486 = vmatpush1.msra.mxu0 %v404
      %487 = vmatprep.subr.mxu0 0.0
      %488 = vmatpush1.msra.mxu0 %v403
      %489 = vmatprep.subr.mxu0 0.0
      %490 = vmatpush1.msra.mxu0 %v402
      %491 = vmatprep.subr.mxu0 0.0
      %492 = vmatpush1.msra.mxu0 %v401
      %493 = vmatprep.subr.mxu0 0.0
      %494 = vmatpush2.msra.mxu0 0.0
      %495 = vmatprep.subr.mxu0 0.0
      %496 = vmatpush2.msra.mxu0 0.0
      %497 = vmatprep.subr.mxu0 0.0
      %498 = vmatpush2.msra.mxu0 0.0
      %499 = vmatprep.subr.mxu0 0.0
      %500 = vmatpush2.msra.mxu0 0.0
      %501 = vmatprep.subr.mxu0 0.0
      %502 = vmatpush2.msra.mxu0 0.0
      %503 = vmatprep.subr.mxu0 0.0
      %504 = vmatpush2.msra.mxu0 0.0
      %505 = vmatprep.subr.mxu0 0.0
      %506 = vmatpush2.msra.mxu0 0.0
      %507 = vmatprep.subr.mxu0 0.0
      %508 = vmatpush2.msra.mxu0 0.0
      %509 = vmatprep.subr.mxu0 0.0
      %510 = vmatpush2.msra.mxu0 0.0
      %511 = vmatprep.subr.mxu0 0.0
      %512 = vmatpush2.msra.mxu0 0.0
      %513 = vmatprep.subr.mxu0 0.0
      %514 = vmatpush2.msra.mxu0 0.0
      %515 = vmatprep.subr.mxu0 0.0
      %516 = vmatpush2.msra.mxu0 0.0
      %517 = vmatprep.subr.mxu0 0.0
      %518 = vmatpush2.msra.mxu0 0.0
      %519 = vmatprep.subr.mxu0 0.0
      %520 = vmatpush2.msra.mxu0 0.0
      %521 = vmatprep.subr.mxu0 0.0
      %522 = vmatpush2.msra.mxu0 0.0
      %523 = vmatprep.subr.mxu0 0.0
      %524 = vmatpush2.msra.mxu0 0.0
      %525 = vmatprep.mubr.f32.mxu0 0.0
      %526 = vmatmul.mubr.f32.gmra.mxu0 %v414
      %v527 = vpop.f32.mrf.mxu0
      %v528 = vadd.f32 %v410, %v527
      %v529 = vpop.f32.mrf.mxu0
      %530 = vmatprep.mubr.f32.mxu0 0.0
      %531 = vmatmul.mubr.f32.gmra.mxu0 %v417
      %v532 = vpop.f32.mrf.mxu0
      %v533 = vadd.f32 %v410, %v532
      %v534 = vpop.f32.mrf.mxu0
      %535 = vmatprep.mubr.f32.mxu0 0.0
      %536 = vmatmul.mubr.f32.gmra.mxu0 %v420
      %v537 = vpop.f32.mrf.mxu0
      %v538 = vadd.f32 %v410, %v537
      %v539 = vpop.f32.mrf.mxu0
      %540 = vmatprep.mubr.f32.mxu0 0.0
      %541 = vmatmul.mubr.f32.gmra.mxu0 %v423
      %v542 = vpop.f32.mrf.mxu0
      %v543 = vadd.f32 %v410, %v542
      %v544 = vpop.f32.mrf.mxu0
      %545 = vmatprep.mubr.f32.mxu0 0.0
      %546 = vmatmul.mubr.f32.gmra.mxu0 %v426
      %v547 = vpop.f32.mrf.mxu0
      %v548 = vadd.f32 %v410, %v547
      %v549 = vpop.f32.mrf.mxu0
      %550 = vmatprep.mubr.f32.mxu0 0.0
      %551 = vmatmul.mubr.f32.gmra.mxu0 %v429
      %v552 = vpop.f32.mrf.mxu0
      %v553 = vadd.f32 %v410, %v552
      %v554 = vpop.f32.mrf.mxu0
      %555 = vmatprep.mubr.f32.mxu0 0.0
      %556 = vmatmul.mubr.f32.gmra.mxu0 %v432
      %v557 = vpop.f32.mrf.mxu0
      %v558 = vadd.f32 %v410, %v557
      %v559 = vpop.f32.mrf.mxu0
      %560 = vmatprep.mubr.f32.mxu0 0.0
      %561 = vmatmul.mubr.f32.gmra.mxu0 %v435
      %v562 = vpop.f32.mrf.mxu0
      %v563 = vadd.f32 %v410, %v562
      %v564 = vpop.f32.mrf.mxu0
      %565 = vmatprep.mubr.f32.mxu0 0.0
      %566 = vmatmul.mubr.f32.gmra.mxu0 %v438
      %v567 = vpop.f32.mrf.mxu0
      %v568 = vadd.f32 %v410, %v567
      %v569 = vpop.f32.mrf.mxu0
      %570 = vmatprep.mubr.f32.mxu0 0.0
      %571 = vmatmul.mubr.f32.gmra.mxu0 %v441
      %v572 = vpop.f32.mrf.mxu0
      %v573 = vadd.f32 %v410, %v572
      %v574 = vpop.f32.mrf.mxu0
      %575 = vmatprep.mubr.f32.mxu0 0.0
      %576 = vmatmul.mubr.f32.gmra.mxu0 %v444
      %v577 = vpop.f32.mrf.mxu0
      %v578 = vadd.f32 %v410, %v577
      %v579 = vpop.f32.mrf.mxu0
      %580 = vmatprep.mubr.f32.mxu0 0.0
      %581 = vmatmul.mubr.f32.gmra.mxu0 %v447
      %v582 = vpop.f32.mrf.mxu0
      %v583 = vadd.f32 %v410, %v582
      %v584 = vpop.f32.mrf.mxu0
      %585 = vmatprep.mubr.f32.mxu0 0.0
      %586 = vmatmul.mubr.f32.gmra.mxu0 %v450
      %v587 = vpop.f32.mrf.mxu0
      %v588 = vadd.f32 %v410, %v587
      %v589 = vpop.f32.mrf.mxu0
      %590 = vmatprep.mubr.f32.mxu0 0.0
      %591 = vmatmul.mubr.f32.gmra.mxu0 %v453
      %v592 = vpop.f32.mrf.mxu0
      %v593 = vadd.f32 %v410, %v592
      %v594 = vpop.f32.mrf.mxu0
      %595 = vmatprep.mubr.f32.mxu0 0.0
      %596 = vmatmul.mubr.f32.gmra.mxu0 %v456
      %v597 = vpop.f32.mrf.mxu0
      %v598 = vadd.f32 %v410, %v597
      %v599 = vpop.f32.mrf.mxu0
      %600 = vmatprep.mubr.f32.mxu0 0.0
      %601 = vmatmul.mubr.f32.gmra.mxu0 %v459
      %v602 = vpop.f32.mrf.mxu0
      %v603 = vadd.f32 %v410, %v602
      %v604 = vpop.f32.mrf.mxu0
      %605 = vdwg.mxu0
      %v606 = vmax.f32 %v528, 0.0
      %v607 = vmax.f32 %v533, 0.0
      %v608 = vmax.f32 %v538, 0.0
      %v609 = vmax.f32 %v543, 0.0
      %v610 = vmax.f32 %v548, 0.0
      %v611 = vmax.f32 %v553, 0.0
      %v612 = vmax.f32 %v558, 0.0
      %v613 = vmax.f32 %v563, 0.0
      %v614 = vmax.f32 %v568, 0.0
      %v615 = vmax.f32 %v573, 0.0
      %v616 = vmax.f32 %v578, 0.0
      %v617 = vmax.f32 %v583, 0.0
      %v618 = vmax.f32 %v588, 0.0
      %v619 = vmax.f32 %v593, 0.0
      %v620 = vmax.f32 %v598, 0.0
      %v621 = vmax.f32 %v603, 0.0
      %v622 = vld [vmem:[%s4] sm:$0xff]
      %v623 = vld [vmem:[%s4 + $0x8] sm:$0xff]
      %v624 = vld [vmem:[%s4 + $0x10] sm:$0xff]
      %v625 = vld [vmem:[%s4 + $0x18] sm:$0xff]
      %v626 = vld [vmem:[%s4 + $0x20] sm:$0xff]
      %v627 = vld [vmem:[%s4 + $0x28] sm:$0xff]
      %v628 = vld [vmem:[%s4 + $0x30] sm:$0xff]
      %v629 = vld [vmem:[%s4 + $0x38] sm:$0xff]
      %v630 = vld [vmem:[%s5] sm:$0x1]
      %v632 = vlaneseq
      %v633 = vshrl.u32 %v632, 7
      %v634 = vsub.s32 0, %v633
      %v635 = vrot.slane %v630, %v634
      %vm637 = vcmask 523264
      %v639 = vsel %vm637, %v606, 0
      %v642 = vsel %vm637, %v607, 0
      %v645 = vsel %vm637, %v608, 0
      %v648 = vsel %vm637, %v609, 0
      %v651 = vsel %vm637, %v610, 0
      %v654 = vsel %vm637, %v611, 0
      %v657 = vsel %vm637, %v612, 0
      %v660 = vsel %vm637, %v613, 0
      %v663 = vsel %vm637, %v614, 0
      %v666 = vsel %vm637, %v615, 0
      %v669 = vsel %vm637, %v616, 0
      %v672 = vsel %vm637, %v617, 0
      %v675 = vsel %vm637, %v618, 0
      %v678 = vsel %vm637, %v619, 0
      %v681 = vsel %vm637, %v620, 0
      %v684 = vsel %vm637, %v621, 0
      %686 = vmatprep.subr.mxu0 0.0
      %687 = vmatpush1.msra.mxu0 0.0
      %688 = vmatprep.subr.mxu0 0.0
      %689 = vmatpush1.msra.mxu0 0.0
      %690 = vmatprep.subr.mxu0 0.0
      %691 = vmatpush1.msra.mxu0 0.0
      %692 = vmatprep.subr.mxu0 0.0
      %693 = vmatpush1.msra.mxu0 0.0
      %694 = vmatprep.subr.mxu0 0.0
      %695 = vmatpush1.msra.mxu0 0.0
      %696 = vmatprep.subr.mxu0 0.0
      %697 = vmatpush1.msra.mxu0 0.0
      %698 = vmatprep.subr.mxu0 0.0
      %699 = vmatpush1.msra.mxu0 0.0
      %700 = vmatprep.subr.mxu0 0.0
      %701 = vmatpush1.msra.mxu0 0.0
      %702 = vmatprep.subr.mxu0 0.0
      %703 = vmatpush1.msra.mxu0 %v629
      %704 = vmatprep.subr.mxu0 0.0
      %705 = vmatpush1.msra.mxu0 %v628
      %706 = vmatprep.subr.mxu0 0.0
      %707 = vmatpush1.msra.mxu0 %v627
      %708 = vmatprep.subr.mxu0 0.0
      %709 = vmatpush1.msra.mxu0 %v626
      %710 = vmatprep.subr.mxu0 0.0
      %711 = vmatpush1.msra.mxu0 %v625
      %712 = vmatprep.subr.mxu0 0.0
      %713 = vmatpush1.msra.mxu0 %v624
      %714 = vmatprep.subr.mxu0 0.0
      %715 = vmatpush1.msra.mxu0 %v623
      %716 = vmatprep.subr.mxu0 0.0
      %717 = vmatpush1.msra.mxu0 %v622
      %718 = vmatprep.subr.mxu0 0.0
      %719 = vmatpush2.msra.mxu0 0.0
      %720 = vmatprep.subr.mxu0 0.0
      %721 = vmatpush2.msra.mxu0 0.0
      %722 = vmatprep.subr.mxu0 0.0
      %723 = vmatpush2.msra.mxu0 0.0
      %724 = vmatprep.subr.mxu0 0.0
      %725 = vmatpush2.msra.mxu0 0.0
      %726 = vmatprep.subr.mxu0 0.0
      %727 = vmatpush2.msra.mxu0 0.0
      %728 = vmatprep.subr.mxu0 0.0
      %729 = vmatpush2.msra.mxu0 0.0
      %730 = vmatprep.subr.mxu0 0.0
      %731 = vmatpush2.msra.mxu0 0.0
      %732 = vmatprep.subr.mxu0 0.0
      %733 = vmatpush2.msra.mxu0 0.0
      %734 = vmatprep.subr.mxu0 0.0
      %735 = vmatpush2.msra.mxu0 0.0
      %736 = vmatprep.subr.mxu0 0.0
      %737 = vmatpush2.msra.mxu0 0.0
      %738 = vmatprep.subr.mxu0 0.0
      %739 = vmatpush2.msra.mxu0 0.0
      %740 = vmatprep.subr.mxu0 0.0
      %741 = vmatpush2.msra.mxu0 0.0
      %742 = vmatprep.subr.mxu0 0.0
      %743 = vmatpush2.msra.mxu0 0.0
      %744 = vmatprep.subr.mxu0 0.0
      %745 = vmatpush2.msra.mxu0 0.0
      %746 = vmatprep.subr.mxu0 0.0
      %747 = vmatpush2.msra.mxu0 0.0
      %748 = vmatprep.subr.mxu0 0.0
      %749 = vmatpush2.msra.mxu0 0.0
      %750 = vmatprep.mubr.f32.mxu0 0.0
      %751 = vmatmul.mubr.f32.gmra.mxu0 %v639
      %v752 = vpop.f32.mrf.mxu0
      %v753 = vadd.f32 %v635, %v752
      %v754 = vpop.f32.mrf.mxu0
      %755 = vmatprep.mubr.f32.mxu0 0.0
      %756 = vmatmul.mubr.f32.gmra.mxu0 %v642
      %v757 = vpop.f32.mrf.mxu0
      %v758 = vadd.f32 %v635, %v757
      %v759 = vpop.f32.mrf.mxu0
      %760 = vmatprep.mubr.f32.mxu0 0.0
      %761 = vmatmul.mubr.f32.gmra.mxu0 %v645
      %v762 = vpop.f32.mrf.mxu0
      %v763 = vadd.f32 %v635, %v762
      %v764 = vpop.f32.mrf.mxu0
      %765 = vmatprep.mubr.f32.mxu0 0.0
      %766 = vmatmul.mubr.f32.gmra.mxu0 %v648
      %v767 = vpop.f32.mrf.mxu0
      %v768 = vadd.f32 %v635, %v767
      %v769 = vpop.f32.mrf.mxu0
      %770 = vmatprep.mubr.f32.mxu0 0.0
      %771 = vmatmul.mubr.f32.gmra.mxu0 %v651
      %v772 = vpop.f32.mrf.mxu0
      %v773 = vadd.f32 %v635, %v772
      %v774 = vpop.f32.mrf.mxu0
      %775 = vmatprep.mubr.f32.mxu0 0.0
      %776 = vmatmul.mubr.f32.gmra.mxu0 %v654
      %v777 = vpop.f32.mrf.mxu0
      %v778 = vadd.f32 %v635, %v777
      %v779 = vpop.f32.mrf.mxu0
      %780 = vmatprep.mubr.f32.mxu0 0.0
      %781 = vmatmul.mubr.f32.gmra.mxu0 %v657
      %v782 = vpop.f32.mrf.mxu0
      %v783 = vadd.f32 %v635, %v782
      %v784 = vpop.f32.mrf.mxu0
      %785 = vmatprep.mubr.f32.mxu0 0.0
      %786 = vmatmul.mubr.f32.gmra.mxu0 %v660
      %v787 = vpop.f32.mrf.mxu0
      %v788 = vadd.f32 %v635, %v787
      %v789 = vpop.f32.mrf.mxu0
      %790 = vmatprep.mubr.f32.mxu0 0.0
      %791 = vmatmul.mubr.f32.gmra.mxu0 %v663
      %v792 = vpop.f32.mrf.mxu0
      %v793 = vadd.f32 %v635, %v792
      %v794 = vpop.f32.mrf.mxu0
      %795 = vmatprep.mubr.f32.mxu0 0.0
      %796 = vmatmul.mubr.f32.gmra.mxu0 %v666
      %v797 = vpop.f32.mrf.mxu0
      %v798 = vadd.f32 %v635, %v797
      %v799 = vpop.f32.mrf.mxu0
      %800 = vmatprep.mubr.f32.mxu0 0.0
      %801 = vmatmul.mubr.f32.gmra.mxu0 %v669
      %v802 = vpop.f32.mrf.mxu0
      %v803 = vadd.f32 %v635, %v802
      %v804 = vpop.f32.mrf.mxu0
      %805 = vmatprep.mubr.f32.mxu0 0.0
      %806 = vmatmul.mubr.f32.gmra.mxu0 %v672
      %v807 = vpop.f32.mrf.mxu0
      %v808 = vadd.f32 %v635, %v807
      %v809 = vpop.f32.mrf.mxu0
      %810 = vmatprep.mubr.f32.mxu0 0.0
      %811 = vmatmul.mubr.f32.gmra.mxu0 %v675
      %v812 = vpop.f32.mrf.mxu0
      %v813 = vadd.f32 %v635, %v812
      %v814 = vpop.f32.mrf.mxu0
      %815 = vmatprep.mubr.f32.mxu0 0.0
      %816 = vmatmul.mubr.f32.gmra.mxu0 %v678
      %v817 = vpop.f32.mrf.mxu0
      %v818 = vadd.f32 %v635, %v817
      %v819 = vpop.f32.mrf.mxu0
      %820 = vmatprep.mubr.f32.mxu0 0.0
      %821 = vmatmul.mubr.f32.gmra.mxu0 %v681
      %v822 = vpop.f32.mrf.mxu0
      %v823 = vadd.f32 %v635, %v822
      %v824 = vpop.f32.mrf.mxu0
      %825 = vmatprep.mubr.f32.mxu0 0.0
      %826 = vmatmul.mubr.f32.gmra.mxu0 %v684
      %v827 = vpop.f32.mrf.mxu0
      %v828 = vadd.f32 %v635, %v827
      %v829 = vpop.f32.mrf.mxu0
      %830 = vdwg.mxu0
      %v831 = vmul.f32 %v753, 0.5
      %v832 = vmul.f32 %v758, 0.5
      %v833 = vmul.f32 %v763, 0.5
      %v834 = vmul.f32 %v768, 0.5
      %v835 = vmul.f32 %v773, 0.5
      %v836 = vmul.f32 %v778, 0.5
      %v837 = vmul.f32 %v783, 0.5
      %v838 = vmul.f32 %v788, 0.5
      %v839 = vmul.f32 %v793, 0.5
      %v840 = vmul.f32 %v798, 0.5
      %v841 = vmul.f32 %v803, 0.5
      %v842 = vmul.f32 %v808, 0.5
      %v843 = vmul.f32 %v813, 0.5
      %v844 = vmul.f32 %v818, 0.5
      %v845 = vmul.f32 %v823, 0.5
      %v846 = vmul.f32 %v828, 0.5
      %v847 = vmul.f32 %v831, 1.442695
      %v848 = vpow.pop %v847
      %v849 = vmul.f32 %v832, 1.442695
      %v850 = vpow.pop %v849
      %v851 = vmul.f32 %v833, 1.442695
      %v852 = vpow.pop %v851
      %v853 = vmul.f32 %v834, 1.442695
      %v854 = vpow.pop %v853
      %v855 = vmul.f32 %v835, 1.442695
      %v856 = vpow.pop %v855
      %v857 = vmul.f32 %v836, 1.442695
      %v858 = vpow.pop %v857
      %v859 = vmul.f32 %v837, 1.442695
      %v860 = vpow.pop %v859
      %v861 = vmul.f32 %v838, 1.442695
      %v862 = vpow.pop %v861
      %v863 = vmul.f32 %v839, 1.442695
      %v864 = vpow.pop %v863
      %v865 = vmul.f32 %v840, 1.442695
      %v866 = vpow.pop %v865
      %v867 = vmul.f32 %v841, 1.442695
      %v868 = vpow.pop %v867
      %v869 = vmul.f32 %v842, 1.442695
      %v870 = vpow.pop %v869
      %v871 = vmul.f32 %v843, 1.442695
      %v872 = vpow.pop %v871
      %v873 = vmul.f32 %v844, 1.442695
      %v874 = vpow.pop %v873
      %v875 = vmul.f32 %v845, 1.442695
      %v876 = vpow.pop %v875
      %v877 = vmul.f32 %v846, 1.442695
      %v878 = vpow.pop %v877
      %v879 = vld [vmem:[%s377] sm:$0xff]
      %v880 = vld [vmem:[%s377 + $0x8] sm:$0xff]
      %v881 = vld [vmem:[%s377 + $0x10] sm:$0xff]
      %v882 = vld [vmem:[%s377 + $0x18] sm:$0xff]
      %v883 = vld [vmem:[%s377 + $0x20] sm:$0xff]
      %v884 = vld [vmem:[%s377 + $0x28] sm:$0xff]
      %v885 = vld [vmem:[%s377 + $0x30] sm:$0xff]
      %v886 = vld [vmem:[%s377 + $0x38] sm:$0xff]
      %v887 = vld [vmem:[%s377 + $0x40] sm:$0xff]
      %v888 = vld [vmem:[%s377 + $0x48] sm:$0xff]
      %v889 = vld [vmem:[%s377 + $0x50] sm:$0xff]
      %v890 = vld [vmem:[%s377 + $0x58] sm:$0xff]
      %v891 = vld [vmem:[%s377 + $0x60] sm:$0xff]
      %v892 = vld [vmem:[%s377 + $0x68] sm:$0xff]
      %v893 = vld [vmem:[%s377 + $0x70] sm:$0xff]
      %v894 = vld [vmem:[%s377 + $0x78] sm:$0xff]
      %911 = vrot.lane.b32.xlu0 %v879, 16
      %v912 = vpop.permute.xlu0 %911
      %913 = vrot.lane.b32.xlu0 %v880, 16
      %v914 = vpop.permute.xlu0 %913
      %915 = vrot.lane.b32.xlu0 %v881, 16
      %v916 = vpop.permute.xlu0 %915
      %917 = vrot.lane.b32.xlu0 %v882, 16
      %v918 = vpop.permute.xlu0 %917
      %919 = vrot.lane.b32.xlu0 %v883, 16
      %v920 = vpop.permute.xlu0 %919
      %921 = vrot.lane.b32.xlu0 %v884, 16
      %v922 = vpop.permute.xlu0 %921
      %923 = vrot.lane.b32.xlu0 %v885, 16
      %v924 = vpop.permute.xlu0 %923
      %925 = vrot.lane.b32.xlu0 %v886, 16
      %v926 = vpop.permute.xlu0 %925
      %927 = vrot.lane.b32.xlu0 %v887, 16
      %v928 = vpop.permute.xlu0 %927
      %929 = vrot.lane.b32.xlu0 %v888, 16
      %v930 = vpop.permute.xlu0 %929
      %931 = vrot.lane.b32.xlu0 %v889, 16
      %v932 = vpop.permute.xlu0 %931
      %933 = vrot.lane.b32.xlu0 %v890, 16
      %v934 = vpop.permute.xlu0 %933
      %935 = vrot.lane.b32.xlu0 %v891, 16
      %v936 = vpop.permute.xlu0 %935
      %937 = vrot.lane.b32.xlu0 %v892, 16
      %v938 = vpop.permute.xlu0 %937
      %939 = vrot.lane.b32.xlu0 %v893, 16
      %v940 = vpop.permute.xlu0 %939
      %941 = vrot.lane.b32.xlu0 %v894, 16
      %v942 = vpop.permute.xlu0 %941
      %v959 = vmul.f32 %v848, %v912
      %v960 = vmul.f32 %v850, %v914
      %v961 = vmul.f32 %v852, %v916
      %v962 = vmul.f32 %v854, %v918
      %v963 = vmul.f32 %v856, %v920
      %v964 = vmul.f32 %v858, %v922
      %v965 = vmul.f32 %v860, %v924
      %v966 = vmul.f32 %v862, %v926
      %v967 = vmul.f32 %v864, %v928
      %v968 = vmul.f32 %v866, %v930
      %v969 = vmul.f32 %v868, %v932
      %v970 = vmul.f32 %v870, %v934
      %v971 = vmul.f32 %v872, %v936
      %v972 = vmul.f32 %v874, %v938
      %v973 = vmul.f32 %v876, %v940
      %v974 = vmul.f32 %v878, %v942
      %991 = vrot.lane.b32.xlu0 %v959, 112
      %v992 = vpop.permute.xlu0 %991
      %993 = vrot.lane.b32.xlu0 %v960, 112
      %v994 = vpop.permute.xlu0 %993
      %995 = vrot.lane.b32.xlu0 %v961, 112
      %v996 = vpop.permute.xlu0 %995
      %997 = vrot.lane.b32.xlu0 %v962, 112
      %v998 = vpop.permute.xlu0 %997
      %999 = vrot.lane.b32.xlu0 %v963, 112
      %v1000 = vpop.permute.xlu0 %999
      %1001 = vrot.lane.b32.xlu0 %v964, 112
      %v1002 = vpop.permute.xlu0 %1001
      %1003 = vrot.lane.b32.xlu0 %v965, 112
      %v1004 = vpop.permute.xlu0 %1003
      %1005 = vrot.lane.b32.xlu0 %v966, 112
      %v1006 = vpop.permute.xlu0 %1005
      %1007 = vrot.lane.b32.xlu0 %v967, 112
      %v1008 = vpop.permute.xlu0 %1007
      %1009 = vrot.lane.b32.xlu0 %v968, 112
      %v1010 = vpop.permute.xlu0 %1009
      %1011 = vrot.lane.b32.xlu0 %v969, 112
      %v1012 = vpop.permute.xlu0 %1011
      %1013 = vrot.lane.b32.xlu0 %v970, 112
      %v1014 = vpop.permute.xlu0 %1013
      %1015 = vrot.lane.b32.xlu0 %v971, 112
      %v1016 = vpop.permute.xlu0 %1015
      %1017 = vrot.lane.b32.xlu0 %v972, 112
      %v1018 = vpop.permute.xlu0 %1017
      %1019 = vrot.lane.b32.xlu0 %v973, 112
      %v1020 = vpop.permute.xlu0 %1019
      %1021 = vrot.lane.b32.xlu0 %v974, 112
      %v1022 = vpop.permute.xlu0 %1021
      %v1039 = vadd.f32 %v753, %v992
      %v1040 = vadd.f32 %v758, %v994
      %v1041 = vadd.f32 %v763, %v996
      %v1042 = vadd.f32 %v768, %v998
      %v1043 = vadd.f32 %v773, %v1000
      %v1044 = vadd.f32 %v778, %v1002
      %v1045 = vadd.f32 %v783, %v1004
      %v1046 = vadd.f32 %v788, %v1006
      %v1047 = vadd.f32 %v793, %v1008
      %v1048 = vadd.f32 %v798, %v1010
      %v1049 = vadd.f32 %v803, %v1012
      %v1050 = vadd.f32 %v808, %v1014
      %v1051 = vadd.f32 %v813, %v1016
      %v1052 = vadd.f32 %v818, %v1018
      %v1053 = vadd.f32 %v823, %v1020
      %v1054 = vadd.f32 %v828, %v1022
      %v1055 = vld [vmem:[%s6] sm:$0xff]
      %v1056 = vld [vmem:[%s6 + $0x8] sm:$0xff]
      %v1057 = vld [vmem:[%s7] sm:$0x1]
      %v1059 = vlaneseq
      %v1060 = vshrl.u32 %v1059, 7
      %v1061 = vsub.s32 0, %v1060
      %v1062 = vrot.slane %v1057, %v1061
      %vm1064 = vcmask 130048
      %v1066 = vsel %vm1064, %v1039, 0
      %v1069 = vsel %vm1064, %v1040, 0
      %v1072 = vsel %vm1064, %v1041, 0
      %v1075 = vsel %vm1064, %v1042, 0
      %v1078 = vsel %vm1064, %v1043, 0
      %v1081 = vsel %vm1064, %v1044, 0
      %v1084 = vsel %vm1064, %v1045, 0
      %v1087 = vsel %vm1064, %v1046, 0
      %v1090 = vsel %vm1064, %v1047, 0
      %v1093 = vsel %vm1064, %v1048, 0
      %v1096 = vsel %vm1064, %v1049, 0
      %v1099 = vsel %vm1064, %v1050, 0
      %v1102 = vsel %vm1064, %v1051, 0
      %v1105 = vsel %vm1064, %v1052, 0
      %v1108 = vsel %vm1064, %v1053, 0
      %v1111 = vsel %vm1064, %v1054, 0
      %1113 = vmatprep.subr.mxu0 0.0
      %1114 = vmatpush1.msra.mxu0 0.0
      %1115 = vmatprep.subr.mxu0 0.0
      %1116 = vmatpush1.msra.mxu0 0.0
      %1117 = vmatprep.subr.mxu0 0.0
      %1118 = vmatpush1.msra.mxu0 0.0
      %1119 = vmatprep.subr.mxu0 0.0
      %1120 = vmatpush1.msra.mxu0 0.0
      %1121 = vmatprep.subr.mxu0 0.0
      %1122 = vmatpush1.msra.mxu0 0.0
      %1123 = vmatprep.subr.mxu0 0.0
      %1124 = vmatpush1.msra.mxu0 0.0
      %1125 = vmatprep.subr.mxu0 0.0
      %1126 = vmatpush1.msra.mxu0 0.0
      %1127 = vmatprep.subr.mxu0 0.0
      %1128 = vmatpush1.msra.mxu0 0.0
      %1129 = vmatprep.subr.mxu0 0.0
      %1130 = vmatpush1.msra.mxu0 0.0
      %1131 = vmatprep.subr.mxu0 0.0
      %1132 = vmatpush1.msra.mxu0 0.0
      %1133 = vmatprep.subr.mxu0 0.0
      %1134 = vmatpush1.msra.mxu0 0.0
      %1135 = vmatprep.subr.mxu0 0.0
      %1136 = vmatpush1.msra.mxu0 0.0
      %1137 = vmatprep.subr.mxu0 0.0
      %1138 = vmatpush1.msra.mxu0 0.0
      %1139 = vmatprep.subr.mxu0 0.0
      %1140 = vmatpush1.msra.mxu0 0.0
      %1141 = vmatprep.subr.mxu0 0.0
      %1142 = vmatpush1.msra.mxu0 %v1056
      %1143 = vmatprep.subr.mxu0 0.0
      %1144 = vmatpush1.msra.mxu0 %v1055
      %1145 = vmatprep.subr.mxu0 0.0
      %1146 = vmatpush2.msra.mxu0 0.0
      %1147 = vmatprep.subr.mxu0 0.0
      %1148 = vmatpush2.msra.mxu0 0.0
      %1149 = vmatprep.subr.mxu0 0.0
      %1150 = vmatpush2.msra.mxu0 0.0
      %1151 = vmatprep.subr.mxu0 0.0
      %1152 = vmatpush2.msra.mxu0 0.0
      %1153 = vmatprep.subr.mxu0 0.0
      %1154 = vmatpush2.msra.mxu0 0.0
      %1155 = vmatprep.subr.mxu0 0.0
      %1156 = vmatpush2.msra.mxu0 0.0
      %1157 = vmatprep.subr.mxu0 0.0
      %1158 = vmatpush2.msra.mxu0 0.0
      %1159 = vmatprep.subr.mxu0 0.0
      %1160 = vmatpush2.msra.mxu0 0.0
      %1161 = vmatprep.subr.mxu0 0.0
      %1162 = vmatpush2.msra.mxu0 0.0
      %1163 = vmatprep.subr.mxu0 0.0
      %1164 = vmatpush2.msra.mxu0 0.0
      %1165 = vmatprep.subr.mxu0 0.0
      %1166 = vmatpush2.msra.mxu0 0.0
      %1167 = vmatprep.subr.mxu0 0.0
      %1168 = vmatpush2.msra.mxu0 0.0
      %1169 = vmatprep.subr.mxu0 0.0
      %1170 = vmatpush2.msra.mxu0 0.0
      %1171 = vmatprep.subr.mxu0 0.0
      %1172 = vmatpush2.msra.mxu0 0.0
      %1173 = vmatprep.subr.mxu0 0.0
      %1174 = vmatpush2.msra.mxu0 0.0
      %1175 = vmatprep.subr.mxu0 0.0
      %1176 = vmatpush2.msra.mxu0 0.0
      %1177 = vmatprep.mubr.f32.mxu0 0.0
      %1178 = vmatmul.mubr.f32.gmra.mxu0 %v1066
      %v1179 = vpop.f32.mrf.mxu0
      %v1180 = vadd.f32 %v1062, %v1179
      %v1181 = vpop.f32.mrf.mxu0
      %1182 = vmatprep.mubr.f32.mxu0 0.0
      %1183 = vmatmul.mubr.f32.gmra.mxu0 %v1069
      %v1184 = vpop.f32.mrf.mxu0
      %v1185 = vadd.f32 %v1062, %v1184
      %v1186 = vpop.f32.mrf.mxu0
      %1187 = vmatprep.mubr.f32.mxu0 0.0
      %1188 = vmatmul.mubr.f32.gmra.mxu0 %v1072
      %v1189 = vpop.f32.mrf.mxu0
      %v1190 = vadd.f32 %v1062, %v1189
      %v1191 = vpop.f32.mrf.mxu0
      %1192 = vmatprep.mubr.f32.mxu0 0.0
      %1193 = vmatmul.mubr.f32.gmra.mxu0 %v1075
      %v1194 = vpop.f32.mrf.mxu0
      %v1195 = vadd.f32 %v1062, %v1194
      %v1196 = vpop.f32.mrf.mxu0
      %1197 = vmatprep.mubr.f32.mxu0 0.0
      %1198 = vmatmul.mubr.f32.gmra.mxu0 %v1078
      %v1199 = vpop.f32.mrf.mxu0
      %v1200 = vadd.f32 %v1062, %v1199
      %v1201 = vpop.f32.mrf.mxu0
      %1202 = vmatprep.mubr.f32.mxu0 0.0
      %1203 = vmatmul.mubr.f32.gmra.mxu0 %v1081
      %v1204 = vpop.f32.mrf.mxu0
      %v1205 = vadd.f32 %v1062, %v1204
      %v1206 = vpop.f32.mrf.mxu0
      %1207 = vmatprep.mubr.f32.mxu0 0.0
      %1208 = vmatmul.mubr.f32.gmra.mxu0 %v1084
      %v1209 = vpop.f32.mrf.mxu0
      %v1210 = vadd.f32 %v1062, %v1209
      %v1211 = vpop.f32.mrf.mxu0
      %1212 = vmatprep.mubr.f32.mxu0 0.0
      %1213 = vmatmul.mubr.f32.gmra.mxu0 %v1087
      %v1214 = vpop.f32.mrf.mxu0
      %v1215 = vadd.f32 %v1062, %v1214
      %v1216 = vpop.f32.mrf.mxu0
      %1217 = vmatprep.mubr.f32.mxu0 0.0
      %1218 = vmatmul.mubr.f32.gmra.mxu0 %v1090
      %v1219 = vpop.f32.mrf.mxu0
      %v1220 = vadd.f32 %v1062, %v1219
      %v1221 = vpop.f32.mrf.mxu0
      %1222 = vmatprep.mubr.f32.mxu0 0.0
      %1223 = vmatmul.mubr.f32.gmra.mxu0 %v1093
      %v1224 = vpop.f32.mrf.mxu0
      %v1225 = vadd.f32 %v1062, %v1224
      %v1226 = vpop.f32.mrf.mxu0
      %1227 = vmatprep.mubr.f32.mxu0 0.0
      %1228 = vmatmul.mubr.f32.gmra.mxu0 %v1096
      %v1229 = vpop.f32.mrf.mxu0
      %v1230 = vadd.f32 %v1062, %v1229
      %v1231 = vpop.f32.mrf.mxu0
      %1232 = vmatprep.mubr.f32.mxu0 0.0
      %1233 = vmatmul.mubr.f32.gmra.mxu0 %v1099
      %v1234 = vpop.f32.mrf.mxu0
      %v1235 = vadd.f32 %v1062, %v1234
      %v1236 = vpop.f32.mrf.mxu0
      %1237 = vmatprep.mubr.f32.mxu0 0.0
      %1238 = vmatmul.mubr.f32.gmra.mxu0 %v1102
      %v1239 = vpop.f32.mrf.mxu0
      %v1240 = vadd.f32 %v1062, %v1239
      %v1241 = vpop.f32.mrf.mxu0
      %1242 = vmatprep.mubr.f32.mxu0 0.0
      %1243 = vmatmul.mubr.f32.gmra.mxu0 %v1105
      %v1244 = vpop.f32.mrf.mxu0
      %v1245 = vadd.f32 %v1062, %v1244
      %v1246 = vpop.f32.mrf.mxu0
      %1247 = vmatprep.mubr.f32.mxu0 0.0
      %1248 = vmatmul.mubr.f32.gmra.mxu0 %v1108
      %v1249 = vpop.f32.mrf.mxu0
      %v1250 = vadd.f32 %v1062, %v1249
      %v1251 = vpop.f32.mrf.mxu0
      %1252 = vmatprep.mubr.f32.mxu0 0.0
      %1253 = vmatmul.mubr.f32.gmra.mxu0 %v1111
      %v1254 = vpop.f32.mrf.mxu0
      %v1255 = vadd.f32 %v1062, %v1254
      %v1256 = vpop.f32.mrf.mxu0
      %1257 = vdwg.mxu0
      %v1258 = vmax.f32 %v1180, 0.0
      %v1259 = vmax.f32 %v1185, 0.0
      %v1260 = vmax.f32 %v1190, 0.0
      %v1261 = vmax.f32 %v1195, 0.0
      %v1262 = vmax.f32 %v1200, 0.0
      %v1263 = vmax.f32 %v1205, 0.0
      %v1264 = vmax.f32 %v1210, 0.0
      %v1265 = vmax.f32 %v1215, 0.0
      %v1266 = vmax.f32 %v1220, 0.0
      %v1267 = vmax.f32 %v1225, 0.0
      %v1268 = vmax.f32 %v1230, 0.0
      %v1269 = vmax.f32 %v1235, 0.0
      %v1270 = vmax.f32 %v1240, 0.0
      %v1271 = vmax.f32 %v1245, 0.0
      %v1272 = vmax.f32 %v1250, 0.0
      %v1273 = vmax.f32 %v1255, 0.0
      %v1274 = vld [vmem:[%s8] sm:$0xff]
      %v1275 = vld [vmem:[%s8 + $0x8] sm:$0xff]
      %v1276 = vld [vmem:[%s8 + $0x10] sm:$0xff]
      %v1277 = vld [vmem:[%s8 + $0x18] sm:$0xff]
      %v1278 = vld [vmem:[%s8 + $0x20] sm:$0xff]
      %v1279 = vld [vmem:[%s8 + $0x28] sm:$0xff]
      %v1280 = vld [vmem:[%s8 + $0x30] sm:$0xff]
      %v1281 = vld [vmem:[%s8 + $0x38] sm:$0xff]
      %v1282 = vld [vmem:[%s9] sm:$0x1]
      %v1284 = vlaneseq
      %v1285 = vshrl.u32 %v1284, 7
      %v1286 = vsub.s32 0, %v1285
      %v1287 = vrot.slane %v1282, %v1286
      %v1290 = vsel %vm637, %v1258, 0
      %v1293 = vsel %vm637, %v1259, 0
      %v1296 = vsel %vm637, %v1260, 0
      %v1299 = vsel %vm637, %v1261, 0
      %v1302 = vsel %vm637, %v1262, 0
      %v1305 = vsel %vm637, %v1263, 0
      %v1308 = vsel %vm637, %v1264, 0
      %v1311 = vsel %vm637, %v1265, 0
      %v1314 = vsel %vm637, %v1266, 0
      %v1317 = vsel %vm637, %v1267, 0
      %v1320 = vsel %vm637, %v1268, 0
      %v1323 = vsel %vm637, %v1269, 0
      %v1326 = vsel %vm637, %v1270, 0
      %v1329 = vsel %vm637, %v1271, 0
      %v1332 = vsel %vm637, %v1272, 0
      %v1335 = vsel %vm637, %v1273, 0
      %1337 = vmatprep.subr.mxu0 0.0
      %1338 = vmatpush1.msra.mxu0 0.0
      %1339 = vmatprep.subr.mxu0 0.0
      %1340 = vmatpush1.msra.mxu0 0.0
      %1341 = vmatprep.subr.mxu0 0.0
      %1342 = vmatpush1.msra.mxu0 0.0
      %1343 = vmatprep.subr.mxu0 0.0
      %1344 = vmatpush1.msra.mxu0 0.0
      %1345 = vmatprep.subr.mxu0 0.0
      %1346 = vmatpush1.msra.mxu0 0.0
      %1347 = vmatprep.subr.mxu0 0.0
      %1348 = vmatpush1.msra.mxu0 0.0
      %1349 = vmatprep.subr.mxu0 0.0
      %1350 = vmatpush1.msra.mxu0 0.0
      %1351 = vmatprep.subr.mxu0 0.0
      %1352 = vmatpush1.msra.mxu0 0.0
      %1353 = vmatprep.subr.mxu0 0.0
      %1354 = vmatpush1.msra.mxu0 %v1281
      %1355 = vmatprep.subr.mxu0 0.0
      %1356 = vmatpush1.msra.mxu0 %v1280
      %1357 = vmatprep.subr.mxu0 0.0
      %1358 = vmatpush1.msra.mxu0 %v1279
      %1359 = vmatprep.subr.mxu0 0.0
      %1360 = vmatpush1.msra.mxu0 %v1278
      %1361 = vmatprep.subr.mxu0 0.0
      %1362 = vmatpush1.msra.mxu0 %v1277
      %1363 = vmatprep.subr.mxu0 0.0
      %1364 = vmatpush1.msra.mxu0 %v1276
      %1365 = vmatprep.subr.mxu0 0.0
      %1366 = vmatpush1.msra.mxu0 %v1275
      %1367 = vmatprep.subr.mxu0 0.0
      %1368 = vmatpush1.msra.mxu0 %v1274
      %1369 = vmatprep.subr.mxu0 0.0
      %1370 = vmatpush2.msra.mxu0 0.0
      %1371 = vmatprep.subr.mxu0 0.0
      %1372 = vmatpush2.msra.mxu0 0.0
      %1373 = vmatprep.subr.mxu0 0.0
      %1374 = vmatpush2.msra.mxu0 0.0
      %1375 = vmatprep.subr.mxu0 0.0
      %1376 = vmatpush2.msra.mxu0 0.0
      %1377 = vmatprep.subr.mxu0 0.0
      %1378 = vmatpush2.msra.mxu0 0.0
      %1379 = vmatprep.subr.mxu0 0.0
      %1380 = vmatpush2.msra.mxu0 0.0
      %1381 = vmatprep.subr.mxu0 0.0
      %1382 = vmatpush2.msra.mxu0 0.0
      %1383 = vmatprep.subr.mxu0 0.0
      %1384 = vmatpush2.msra.mxu0 0.0
      %1385 = vmatprep.subr.mxu0 0.0
      %1386 = vmatpush2.msra.mxu0 0.0
      %1387 = vmatprep.subr.mxu0 0.0
      %1388 = vmatpush2.msra.mxu0 0.0
      %1389 = vmatprep.subr.mxu0 0.0
      %1390 = vmatpush2.msra.mxu0 0.0
      %1391 = vmatprep.subr.mxu0 0.0
      %1392 = vmatpush2.msra.mxu0 0.0
      %1393 = vmatprep.subr.mxu0 0.0
      %1394 = vmatpush2.msra.mxu0 0.0
      %1395 = vmatprep.subr.mxu0 0.0
      %1396 = vmatpush2.msra.mxu0 0.0
      %1397 = vmatprep.subr.mxu0 0.0
      %1398 = vmatpush2.msra.mxu0 0.0
      %1399 = vmatprep.subr.mxu0 0.0
      %1400 = vmatpush2.msra.mxu0 0.0
      %1401 = vmatprep.mubr.f32.mxu0 0.0
      %1402 = vmatmul.mubr.f32.gmra.mxu0 %v1290
      %v1403 = vpop.f32.mrf.mxu0
      %v1404 = vadd.f32 %v1287, %v1403
      %v1405 = vpop.f32.mrf.mxu0
      %1406 = vmatprep.mubr.f32.mxu0 0.0
      %1407 = vmatmul.mubr.f32.gmra.mxu0 %v1293
      %v1408 = vpop.f32.mrf.mxu0
      %v1409 = vadd.f32 %v1287, %v1408
      %v1410 = vpop.f32.mrf.mxu0
      %1411 = vmatprep.mubr.f32.mxu0 0.0
      %1412 = vmatmul.mubr.f32.gmra.mxu0 %v1296
      %v1413 = vpop.f32.mrf.mxu0
      %v1414 = vadd.f32 %v1287, %v1413
      %v1415 = vpop.f32.mrf.mxu0
      %1416 = vmatprep.mubr.f32.mxu0 0.0
      %1417 = vmatmul.mubr.f32.gmra.mxu0 %v1299
      %v1418 = vpop.f32.mrf.mxu0
      %v1419 = vadd.f32 %v1287, %v1418
      %v1420 = vpop.f32.mrf.mxu0
      %1421 = vmatprep.mubr.f32.mxu0 0.0
      %1422 = vmatmul.mubr.f32.gmra.mxu0 %v1302
      %v1423 = vpop.f32.mrf.mxu0
      %v1424 = vadd.f32 %v1287, %v1423
      %v1425 = vpop.f32.mrf.mxu0
      %1426 = vmatprep.mubr.f32.mxu0 0.0
      %1427 = vmatmul.mubr.f32.gmra.mxu0 %v1305
      %v1428 = vpop.f32.mrf.mxu0
      %v1429 = vadd.f32 %v1287, %v1428
      %v1430 = vpop.f32.mrf.mxu0
      %1431 = vmatprep.mubr.f32.mxu0 0.0
      %1432 = vmatmul.mubr.f32.gmra.mxu0 %v1308
      %v1433 = vpop.f32.mrf.mxu0
      %v1434 = vadd.f32 %v1287, %v1433
      %v1435 = vpop.f32.mrf.mxu0
      %1436 = vmatprep.mubr.f32.mxu0 0.0
      %1437 = vmatmul.mubr.f32.gmra.mxu0 %v1311
      %v1438 = vpop.f32.mrf.mxu0
      %v1439 = vadd.f32 %v1287, %v1438
      %v1440 = vpop.f32.mrf.mxu0
      %1441 = vmatprep.mubr.f32.mxu0 0.0
      %1442 = vmatmul.mubr.f32.gmra.mxu0 %v1314
      %v1443 = vpop.f32.mrf.mxu0
      %v1444 = vadd.f32 %v1287, %v1443
      %v1445 = vpop.f32.mrf.mxu0
      %1446 = vmatprep.mubr.f32.mxu0 0.0
      %1447 = vmatmul.mubr.f32.gmra.mxu0 %v1317
      %v1448 = vpop.f32.mrf.mxu0
      %v1449 = vadd.f32 %v1287, %v1448
      %v1450 = vpop.f32.mrf.mxu0
      %1451 = vmatprep.mubr.f32.mxu0 0.0
      %1452 = vmatmul.mubr.f32.gmra.mxu0 %v1320
      %v1453 = vpop.f32.mrf.mxu0
      %v1454 = vadd.f32 %v1287, %v1453
      %v1455 = vpop.f32.mrf.mxu0
      %1456 = vmatprep.mubr.f32.mxu0 0.0
      %1457 = vmatmul.mubr.f32.gmra.mxu0 %v1323
      %v1458 = vpop.f32.mrf.mxu0
      %v1459 = vadd.f32 %v1287, %v1458
      %v1460 = vpop.f32.mrf.mxu0
      %1461 = vmatprep.mubr.f32.mxu0 0.0
      %1462 = vmatmul.mubr.f32.gmra.mxu0 %v1326
      %v1463 = vpop.f32.mrf.mxu0
      %v1464 = vadd.f32 %v1287, %v1463
      %v1465 = vpop.f32.mrf.mxu0
      %1466 = vmatprep.mubr.f32.mxu0 0.0
      %1467 = vmatmul.mubr.f32.gmra.mxu0 %v1329
      %v1468 = vpop.f32.mrf.mxu0
      %v1469 = vadd.f32 %v1287, %v1468
      %v1470 = vpop.f32.mrf.mxu0
      %1471 = vmatprep.mubr.f32.mxu0 0.0
      %1472 = vmatmul.mubr.f32.gmra.mxu0 %v1332
      %v1473 = vpop.f32.mrf.mxu0
      %v1474 = vadd.f32 %v1287, %v1473
      %v1475 = vpop.f32.mrf.mxu0
      %1476 = vmatprep.mubr.f32.mxu0 0.0
      %1477 = vmatmul.mubr.f32.gmra.mxu0 %v1335
      %v1478 = vpop.f32.mrf.mxu0
      %v1479 = vadd.f32 %v1287, %v1478
      %v1480 = vpop.f32.mrf.mxu0
      %1481 = vdwg.mxu0
      %1482 = vst.msk [vmem:[%s383] sm:$0xff] %vm412, %v1404
      %1483 = vst.msk [vmem:[%s383 + $0x8] sm:$0xff] %vm412, %v1409
      %1484 = vst.msk [vmem:[%s383 + $0x10] sm:$0xff] %vm412, %v1414
      %1485 = vst.msk [vmem:[%s383 + $0x18] sm:$0xff] %vm412, %v1419
      %1486 = vst.msk [vmem:[%s383 + $0x20] sm:$0xff] %vm412, %v1424
      %1487 = vst.msk [vmem:[%s383 + $0x28] sm:$0xff] %vm412, %v1429
      %1488 = vst.msk [vmem:[%s383 + $0x30] sm:$0xff] %vm412, %v1434
      %1489 = vst.msk [vmem:[%s383 + $0x38] sm:$0xff] %vm412, %v1439
      %1490 = vst.msk [vmem:[%s383 + $0x40] sm:$0xff] %vm412, %v1444
      %1491 = vst.msk [vmem:[%s383 + $0x48] sm:$0xff] %vm412, %v1449
      %1492 = vst.msk [vmem:[%s383 + $0x50] sm:$0xff] %vm412, %v1454
      %1493 = vst.msk [vmem:[%s383 + $0x58] sm:$0xff] %vm412, %v1459
      %1494 = vst.msk [vmem:[%s383 + $0x60] sm:$0xff] %vm412, %v1464
      %1495 = vst.msk [vmem:[%s383 + $0x68] sm:$0xff] %vm412, %v1469
      %1496 = vst.msk [vmem:[%s383 + $0x70] sm:$0xff] %vm412, %v1474
      %1497 = vst.msk [vmem:[%s383 + $0x78] sm:$0xff] %vm412, %v1479
      %1514 = vrot.lane.b32.xlu0 %v753, 32
      %v1515 = vpop.permute.xlu0 %1514
      %1516 = vrot.lane.b32.xlu0 %v758, 32
      %v1517 = vpop.permute.xlu0 %1516
      %1518 = vrot.lane.b32.xlu0 %v763, 32
      %v1519 = vpop.permute.xlu0 %1518
      %1520 = vrot.lane.b32.xlu0 %v768, 32
      %v1521 = vpop.permute.xlu0 %1520
      %1522 = vrot.lane.b32.xlu0 %v773, 32
      %v1523 = vpop.permute.xlu0 %1522
      %1524 = vrot.lane.b32.xlu0 %v778, 32
      %v1525 = vpop.permute.xlu0 %1524
      %1526 = vrot.lane.b32.xlu0 %v783, 32
      %v1527 = vpop.permute.xlu0 %1526
      %1528 = vrot.lane.b32.xlu0 %v788, 32
      %v1529 = vpop.permute.xlu0 %1528
      %1530 = vrot.lane.b32.xlu0 %v793, 32
      %v1531 = vpop.permute.xlu0 %1530
      %1532 = vrot.lane.b32.xlu0 %v798, 32
      %v1533 = vpop.permute.xlu0 %1532
      %1534 = vrot.lane.b32.xlu0 %v803, 32
      %v1535 = vpop.permute.xlu0 %1534
      %1536 = vrot.lane.b32.xlu0 %v808, 32
      %v1537 = vpop.permute.xlu0 %1536
      %1538 = vrot.lane.b32.xlu0 %v813, 32
      %v1539 = vpop.permute.xlu0 %1538
      %1540 = vrot.lane.b32.xlu0 %v818, 32
      %v1541 = vpop.permute.xlu0 %1540
      %1542 = vrot.lane.b32.xlu0 %v823, 32
      %v1543 = vpop.permute.xlu0 %1542
      %1544 = vrot.lane.b32.xlu0 %v828, 32
      %v1545 = vpop.permute.xlu0 %1544
      %vm1562 = vcmask 523520
      %1563 = vst.msk [vmem:[%s383] sm:$0xff] %vm1562, %v1515
      %1564 = vst.msk [vmem:[%s383 + $0x8] sm:$0xff] %vm1562, %v1517
      %1565 = vst.msk [vmem:[%s383 + $0x10] sm:$0xff] %vm1562, %v1519
      %1566 = vst.msk [vmem:[%s383 + $0x18] sm:$0xff] %vm1562, %v1521
      %1567 = vst.msk [vmem:[%s383 + $0x20] sm:$0xff] %vm1562, %v1523
      %1568 = vst.msk [vmem:[%s383 + $0x28] sm:$0xff] %vm1562, %v1525
      %1569 = vst.msk [vmem:[%s383 + $0x30] sm:$0xff] %vm1562, %v1527
      %1570 = vst.msk [vmem:[%s383 + $0x38] sm:$0xff] %vm1562, %v1529
      %1571 = vst.msk [vmem:[%s383 + $0x40] sm:$0xff] %vm1562, %v1531
      %1572 = vst.msk [vmem:[%s383 + $0x48] sm:$0xff] %vm1562, %v1533
      %1573 = vst.msk [vmem:[%s383 + $0x50] sm:$0xff] %vm1562, %v1535
      %1574 = vst.msk [vmem:[%s383 + $0x58] sm:$0xff] %vm1562, %v1537
      %1575 = vst.msk [vmem:[%s383 + $0x60] sm:$0xff] %vm1562, %v1539
      %1576 = vst.msk [vmem:[%s383 + $0x68] sm:$0xff] %vm1562, %v1541
      %1577 = vst.msk [vmem:[%s383 + $0x70] sm:$0xff] %vm1562, %v1543
      %1578 = vst.msk [vmem:[%s383 + $0x78] sm:$0xff] %vm1562, %v1545
      %1579 = vrot.lane.b32.xlu0 %v1039, 64
      %v1580 = vpop.permute.xlu0 %1579
      %1581 = vrot.lane.b32.xlu0 %v1040, 64
      %v1582 = vpop.permute.xlu0 %1581
      %1583 = vrot.lane.b32.xlu0 %v1041, 64
      %v1584 = vpop.permute.xlu0 %1583
      %1585 = vrot.lane.b32.xlu0 %v1042, 64
      %v1586 = vpop.permute.xlu0 %1585
      %1587 = vrot.lane.b32.xlu0 %v1043, 64
      %v1588 = vpop.permute.xlu0 %1587
      %1589 = vrot.lane.b32.xlu0 %v1044, 64
      %v1590 = vpop.permute.xlu0 %1589
      %1591 = vrot.lane.b32.xlu0 %v1045, 64
      %v1592 = vpop.permute.xlu0 %1591
      %1593 = vrot.lane.b32.xlu0 %v1046, 64
      %v1594 = vpop.permute.xlu0 %1593
      %1595 = vrot.lane.b32.xlu0 %v1047, 64
      %v1596 = vpop.permute.xlu0 %1595
      %1597 = vrot.lane.b32.xlu0 %v1048, 64
      %v1598 = vpop.permute.xlu0 %1597
      %1599 = vrot.lane.b32.xlu0 %v1049, 64
      %v1600 = vpop.permute.xlu0 %1599
      %1601 = vrot.lane.b32.xlu0 %v1050, 64
      %v1602 = vpop.permute.xlu0 %1601
      %1603 = vrot.lane.b32.xlu0 %v1051, 64
      %v1604 = vpop.permute.xlu0 %1603
      %1605 = vrot.lane.b32.xlu0 %v1052, 64
      %v1606 = vpop.permute.xlu0 %1605
      %1607 = vrot.lane.b32.xlu0 %v1053, 64
      %v1608 = vpop.permute.xlu0 %1607
      %1609 = vrot.lane.b32.xlu0 %v1054, 64
      %v1610 = vpop.permute.xlu0 %1609
      %vm1627 = vcmask 654848
      %1628 = vst.msk [vmem:[%s383] sm:$0xff] %vm1627, %v1580
      %1629 = vst.msk [vmem:[%s383 + $0x8] sm:$0xff] %vm1627, %v1582
      %1630 = vst.msk [vmem:[%s383 + $0x10] sm:$0xff] %vm1627, %v1584
      %1631 = vst.msk [vmem:[%s383 + $0x18] sm:$0xff] %vm1627, %v1586
      %1632 = vst.msk [vmem:[%s383 + $0x20] sm:$0xff] %vm1627, %v1588
      %1633 = vst.msk [vmem:[%s383 + $0x28] sm:$0xff] %vm1627, %v1590
      %1634 = vst.msk [vmem:[%s383 + $0x30] sm:$0xff] %vm1627, %v1592
      %1635 = vst.msk [vmem:[%s383 + $0x38] sm:$0xff] %vm1627, %v1594
      %1636 = vst.msk [vmem:[%s383 + $0x40] sm:$0xff] %vm1627, %v1596
      %1637 = vst.msk [vmem:[%s383 + $0x48] sm:$0xff] %vm1627, %v1598
      %1638 = vst.msk [vmem:[%s383 + $0x50] sm:$0xff] %vm1627, %v1600
      %1639 = vst.msk [vmem:[%s383 + $0x58] sm:$0xff] %vm1627, %v1602
      %1640 = vst.msk [vmem:[%s383 + $0x60] sm:$0xff] %vm1627, %v1604
      %1641 = vst.msk [vmem:[%s383 + $0x68] sm:$0xff] %vm1627, %v1606
      %1642 = vst.msk [vmem:[%s383 + $0x70] sm:$0xff] %vm1627, %v1608
      %1643 = vst.msk [vmem:[%s383 + $0x78] sm:$0xff] %vm1627, %v1610
      %vm1644 = vcmask 1048192
      %1645 = vst.msk [vmem:[%s383] sm:$0xff] %vm1644, 0.0
      %1646 = vst.msk [vmem:[%s383 + $0x8] sm:$0xff] %vm1644, 0.0
      %1647 = vst.msk [vmem:[%s383 + $0x10] sm:$0xff] %vm1644, 0.0
      %1648 = vst.msk [vmem:[%s383 + $0x18] sm:$0xff] %vm1644, 0.0
      %1649 = vst.msk [vmem:[%s383 + $0x20] sm:$0xff] %vm1644, 0.0
      %1650 = vst.msk [vmem:[%s383 + $0x28] sm:$0xff] %vm1644, 0.0
      %1651 = vst.msk [vmem:[%s383 + $0x30] sm:$0xff] %vm1644, 0.0
      %1652 = vst.msk [vmem:[%s383 + $0x38] sm:$0xff] %vm1644, 0.0
      %1653 = vst.msk [vmem:[%s383 + $0x40] sm:$0xff] %vm1644, 0.0
      %1654 = vst.msk [vmem:[%s383 + $0x48] sm:$0xff] %vm1644, 0.0
      %1655 = vst.msk [vmem:[%s383 + $0x50] sm:$0xff] %vm1644, 0.0
      %1656 = vst.msk [vmem:[%s383 + $0x58] sm:$0xff] %vm1644, 0.0
      %1657 = vst.msk [vmem:[%s383 + $0x60] sm:$0xff] %vm1644, 0.0
      %1658 = vst.msk [vmem:[%s383 + $0x68] sm:$0xff] %vm1644, 0.0
      %1659 = vst.msk [vmem:[%s383 + $0x70] sm:$0xff] %vm1644, 0.0
      %1660 = vst.msk [vmem:[%s383 + $0x78] sm:$0xff] %vm1644, 0.0
      %s1661 = smul.u32 16, %s21
      %p1662 = scmp.lt.s32.totalorder %s1661, 31
      %s1663 = scalar_select %p1662, %s1661, 31
      %s1664 = smul.addr %s1663, 8
      %s1665 = scalar_lea.vmem %s10, %s1664
      // Predicated region
      $region61: #{vae_forward.1} parent=59 // pred_check
        %p1666 = pneg %p259
      $region62: #{vae_forward.1} parent=59 // pred_check_branch
        %1668 = sbr.rel (%p1666) target = $region64
      $region63: #{vae_forward.1} parent=59 // pred_region
        %s1669 = smul.u32 16, %s21
      $region64: #{vae_forward.1} parent=59 // pred_fallthru
        _
    $region60: #{vae_forward.1} parent=5 // pred_fallthru
      _
    %p1670 = scmp.le.s32.totalorder 2, %s16
    // Predicated region
    $region65: #{vae_forward.1} parent=5 // pred_check
      %p1671 = pneg %p1670
    $region66: #{vae_forward.1} parent=5 // pred_check_branch
      %1673 = sbr.rel (%p1671) target = $region68
    $region67: #{vae_forward.1} parent=5 // pred_region
      %s1674 = ssub.s32 %s16, 2
      // Predicated region
      $region69: #{vae_forward.1} parent=67 // pred_check
        %p1675 = pneg %p265
      $region70: #{vae_forward.1} parent=67 // pred_check_branch
        %1677 = sbr.rel (%p1675) target = $region72
      $region71: #{vae_forward.1} parent=67 // pred_region
        %s1678 = smul.u32 16, %s22
        %p1679 = scmp.lt.s32.totalorder %s1678, 31
        %s1680 = scalar_select %p1679, %s1678, 31
        %s1681 = smul.addr %s1680, 8
        %s1682 = scalar_lea.vmem %s10, %s1681
      $region72: #{vae_forward.1} parent=67 // pred_fallthru
        _
    $region68: #{vae_forward.1} parent=5 // pred_fallthru
      _
  $region6: #{vae_forward.1} parent=0 // loop_footer
    %s20 = sadd.s32 1, %s16
  $region7: #{vae_forward.1} parent=0 // loop_footer_branch
    %15 = sbr.rel target = $region3
  $region8: #{vae_forward.1} parent=0 // loop_exit
    _

</llo_original>
